<compile_context>
chip_gen: v5e
topology: v5e:2x2
jax: 0.10.0
libtpu: 0.0.40
codegen_flags: <defaults>
</compile_context>

<pallas_src>
import functools

import jax
import jax.numpy as jnp
from jax import lax
from jax.experimental import pallas as pl
from jax.experimental.pallas import tpu as pltpu

_NEG = -1e30  # -inf surrogate (avoids inf - inf NaNs)


def _round_up(x, m):
    return ((x + m - 1) // m) * m


def _cdiv(a, b):
    return (a + b - 1) // b


def _vmem_bytes(block_r, block_c, d):
    """Rough per-step VMEM footprint estimate (bytes)."""
    feat = 2 * 2 * (block_r + block_c) * d          # double-buffered bf16 feature tiles
    tmps = 6 * block_r * block_c * 4                # scores / masks / exp f32 temporaries
    scr = 3 * block_r * 128 * 4                     # lane-padded [block_r, 1] f32 scratch
    io = 2 * (3 * block_r * 128 * 4 + block_c * 128 * 4)  # labels / pc / output blocks
    return feat + tmps + scr + io


def _supcon_kernel(feat_row_ref, feat_col_ref, lbl_row_ref, lbl_col_ref, pc_ref,
                   out_ref, m_sc, z_sc, ps_sc,
                   *, inv_temp, block_r, block_c, n_valid, mask_cols):
    # feat_row_ref: [block_r, D] bf16 anchor rows (resident across the k sweep)
    # feat_col_ref: [block_c, D] bf16 contrast columns
    # lbl_row_ref : [block_r, 1] i32, lbl_col_ref: [1, block_c] i32 (lane-dense)
    # pc_ref      : [block_r, 1] f32 per-anchor positive counts (from wrapper)
    # out_ref     : [block_r, 1] f32 per-anchor mean log-prob over positives
    # scratch     : m (running max), z (sum exp, non-self), ps (sum pos logits)
    i = pl.program_id(0)
    k = pl.program_id(1)
    nk = pl.num_programs(1)

    @pl.when(k == 0)
    def _init():
        m_sc[...] = jnp.full(m_sc.shape, _NEG, jnp.float32)
        z_sc[...] = jnp.zeros(z_sc.shape, jnp.float32)
        ps_sc[...] = jnp.zeros(ps_sc.shape, jnp.float32)

    # bf16 operands straight into the MXU, f32 accumulation; 1/T applied to the
    # f32 result (VPU filler under the MXU).  Contract last dims -> no transpose.
    scores = lax.dot_general(
        feat_row_ref[...], feat_col_ref[...],
        dimension_numbers=(((1,), (1,)), ((), ())),
        preferred_element_type=jnp.float32) * jnp.float32(inv_temp)   # [block_r, block_c]

    lbl_r = lbl_row_ref[...]                                          # [block_r, 1]
    lbl_c = lbl_col_ref[...]                                          # [1, block_c]
    same = lbl_r == lbl_c                                             # [block_r, block_c]

    if mask_cols:
        # Column-padding mask (only emitted when N was padded up).
        col_idx = k * block_c + lax.broadcasted_iota(jnp.int32, (1, block_c), 1)
        col_ok = col_idx < n_valid
        scores_v = jnp.where(col_ok, scores, jnp.float32(_NEG))
        pos = jnp.logical_and(same, col_ok).astype(jnp.float32)
    else:
        scores_v = scores
        pos = same.astype(jnp.float32)

    # Online max / rescale (max includes the self column, like the reference).
    m_prev = m_sc[...]
    m_cur = jnp.maximum(m_prev, jnp.max(scores_v, axis=1, keepdims=True))
    alpha = jnp.exp(m_prev - m_cur)
    exp_s = jnp.exp(scores_v - m_cur)   # f32 exp (v5e-safe); padded cols -> 0

    def _accumulate(exp_t, pos_t):
        z_sc[...] = alpha * z_sc[...] + jnp.sum(exp_t, axis=1, keepdims=True)
        ps_sc[...] = ps_sc[...] + jnp.sum(pos_t * scores, axis=1, keepdims=True)

    # Self-exclusion only on tiles whose column range overlaps the anchor rows
    # (block_r is a multiple of block_c and both are aligned).
    col0 = k * block_c
    on_diag = jnp.logical_and(col0 >= i * block_r, col0 < (i + 1) * block_r)

    @pl.when(on_diag)
    def _diag_tile():
        row_g = i * block_r + lax.broadcasted_iota(jnp.int32, (block_r, block_c), 0)
        col_g = col0 + lax.broadcasted_iota(jnp.int32, (block_r, block_c), 1)
        not_self = (row_g != col_g).astype(jnp.float32)
        _accumulate(exp_s * not_self, pos * not_self)

    @pl.when(jnp.logical_not(on_diag))
    def _off_diag_tile():
        _accumulate(exp_s, pos)

    m_sc[...] = m_cur

    @pl.when(k == nk - 1)
    def _finalize():
        pc = pc_ref[...]
        lse = m_sc[...] + jnp.log(z_sc[...] + 1e-12)
        # sum_pos(logits) - count*(m + log(Z+eps)), divided by (count + eps)
        out_ref[...] = (ps_sc[...] - pc * lse) / (pc + 1e-12)


def supcon_loss(features, labels, temperature=0.07, feature_dtype=jnp.bfloat16):
    """features: [B, V, D] float, labels: [B] int. Returns scalar f32 loss."""
    B, V, D = features.shape
    N = B * V

    # Per-generation VMEM budget (v5e/v6e 128 MiB, v7x 64 MiB physical per TC);
    # keep 25% headroom for compiler-internal scratch.
    try:
        phys_vmem = int(pltpu.get_tpu_info().vmem_capacity_bytes)
    except Exception:
        phys_vmem = 64 * 1024 * 1024   # conservative fallback (v7x)
    vmem_cap = (phys_vmem * 3) // 4

    # Column (reduction) tile is MXU-friendly 128/256; anchor row tile is as
    # large as the VMEM budget allows, but capped so there are >= 2 row blocks
    # (lets v7x megacore shard the parallel row axis; no-op on 1-TC chips).
    block_c = 128 if N <= 128 else 256
    n_min = _round_up(N, block_c)
    if n_min <= block_c:
        cap_r = block_c
    else:
        cap_r = max(block_c, _round_up(_cdiv(N, 2), block_c))
    block_r = block_c
    for mult in (4, 3, 2, 1):
        b = mult * block_c
        if b <= cap_r and 2 * _vmem_bytes(b, block_c, D) <= vmem_cap:
            block_r = b
            break

    n_pad = _round_up(N, block_r)           # block_r is a multiple of block_c
    mask_cols = n_pad != N
    n_row_blocks = n_pad // block_r
    n_col_blocks = n_pad // block_c

    # Contrast set == anchor set.  The loss is a mean over permutation-invariant
    # per-anchor terms, so the copy-free batch-major reshape is equivalent to
    # torch.cat(torch.unbind(features, dim=1), dim=0) (view-major) ordering.
    contrast = jnp.reshape(features, (N, D)).astype(feature_dtype)
    lbl_flat = jnp.repeat(jnp.reshape(labels, (-1,)).astype(jnp.int32), V)

    if mask_cols:
        # Pad (in bf16) only when needed; -1 label sentinel is benign: padded
        # columns are masked by col_ok and padded rows are sliced off below.
        feat = jnp.zeros((n_pad, D), feature_dtype).at[:N].set(contrast)
        lbl = jnp.full((n_pad,), -1, jnp.int32).at[:N].set(lbl_flat)
    else:
        feat = contrast
        lbl = lbl_flat
    lbl_row = lbl.reshape(n_pad, 1)
    lbl_col = lbl.reshape(1, n_pad)

    # Per-anchor positive counts: pure O(B^2) label statistic, computed once in
    # the wrapper instead of re-reduced over every NxN tile.
    lbl_b = jnp.reshape(labels, (-1,)).astype(jnp.int32)
    cnt_b = jnp.sum((lbl_b[:, None] == lbl_b[None, :]).astype(jnp.float32), axis=1)
    pc = jnp.repeat(V * cnt_b - 1.0, V)
    if mask_cols:
        pc = jnp.zeros((n_pad,), jnp.float32).at[:N].set(pc)
    pc = pc.reshape(n_pad, 1)

    vmem_limit = int(min(vmem_cap,
                         max(2 * _vmem_bytes(block_r, block_c, D),
                             16 * 1024 * 1024)))

    kernel = functools.partial(
        _supcon_kernel,
        inv_temp=1.0 / float(temperature),
        block_r=block_r,
        block_c=block_c,
        n_valid=N,
        mask_cols=mask_cols,
    )

    grid_spec = pltpu.PrefetchScalarGridSpec(
        num_scalar_prefetch=0,
        grid=(n_row_blocks, n_col_blocks),  # (anchor rows: parallel, contrast cols: reduction)
        in_specs=[
            pl.BlockSpec((block_r, D), lambda i, k: (i, 0)),   # anchor rows (resident over k)
            pl.BlockSpec((block_c, D), lambda i, k: (k, 0)),   # contrast columns
            pl.BlockSpec((block_r, 1), lambda i, k: (i, 0)),   # row labels
            pl.BlockSpec((1, block_c), lambda i, k: (0, k)),   # col labels (lane-dense)
            pl.BlockSpec((block_r, 1), lambda i, k: (i, 0)),   # positive counts
        ],
        out_specs=pl.BlockSpec((block_r, 1), lambda i, k: (i, 0)),
        scratch_shapes=[
            pltpu.VMEM((block_r, 1), jnp.float32),  # running max
            pltpu.VMEM((block_r, 1), jnp.float32),  # sum exp (non-self)
            pltpu.VMEM((block_r, 1), jnp.float32),  # sum of positive logits
        ],
    )

    mean_log_prob_pos = pl.pallas_call(
        kernel,
        out_shape=jax.ShapeDtypeStruct((n_pad, 1), jnp.float32),
        grid_spec=grid_spec,
        compiler_params=pltpu.CompilerParams(
            dimension_semantics=("parallel", "arbitrary"),
            vmem_limit_bytes=vmem_limit,
        ),
    )(feat, feat, lbl_row, lbl_col, pc)

    # Tiny final reduction in plain JAX (keeps the row grid axis parallel).
    return -jnp.mean(mean_log_prob_pos.reshape(n_pad)[:N])


def _supcon_reference(features, labels, temperature):
    """Pure-JAX dense reference (mirrors the PyTorch module, view-major order)."""
    B, V, D = features.shape
    N = B * V
    contrast = jnp.transpose(features, (1, 0, 2)).reshape(N, D).astype(jnp.float32)
    lbl = jnp.tile(jnp.reshape(labels, (-1,)).astype(jnp.int32), V)
    logits = jnp.matmul(contrast, contrast.T,
                        precision=lax.Precision.HIGHEST) / temperature
    logits = logits - jnp.max(logits, axis=1, keepdims=True)
    mask = (lbl[:, None] == lbl[None, :]).astype(jnp.float32)
    logits_mask = 1.0 - jnp.eye(N, dtype=jnp.float32)
    mask = mask * logits_mask
    exp_logits = jnp.exp(logits) * logits_mask
    log_prob = logits - jnp.log(jnp.sum(exp_logits, axis=1, keepdims=True) + 1e-12)
    mlpp = jnp.sum(mask * log_prob, axis=1) / (jnp.sum(mask, axis=1) + 1e-12)
    return -jnp.mean(mlpp)


if __name__ == "__main__":
    key = jax.random.PRNGKey(0)
    kf, kl = jax.random.split(key)

    B, V, D = 8, 2, 32  # batch, n_views, feature_dim
    features = jax.random.normal(kf, (B, V, D), dtype=jnp.float32)
    # L2-normalize features along the last dim (typical SupCon input)
    features = features / jnp.linalg.norm(features, axis=-1, keepdims=True)
    labels = jax.random.randint(kl, (B,), 0, 4, dtype=jnp.int32)

    loss = supcon_loss(features, labels, temperature=0.07)
    jax.block_until_ready(loss)

    ref = _supcon_reference(features, labels, 0.07)
    assert loss.shape == () and bool(jnp.isfinite(loss))
    # bf16 MXU operands vs. the HIGHEST-precision f32 reference: expected
    # quantization difference, so the tolerance is loosened to ~1e-2 relative.
    assert bool(jnp.allclose(loss, ref, rtol=3e-2, atol=3e-2)), (loss, ref)
    print("KERNEL_OK")
</pallas_src>

<mosaic_0001>
module attributes {stable_mosaic.version = 11 : i64} {
  func.func @_supcon_kernel(%arg0: i32, %arg1: i32, %arg2: memref<128x32xbf16, #tpu.memory_space<vmem>>, %arg3: memref<128x32xbf16, #tpu.memory_space<vmem>>, %arg4: memref<128x1xi32, #tpu.memory_space<vmem>>, %arg5: memref<1x128xi32, #tpu.memory_space<vmem>>, %arg6: memref<128x1xf32, #tpu.memory_space<vmem>>, %arg7: memref<128x1xf32, #tpu.memory_space<vmem>>, %arg8: memref<128x1xf32, #tpu.memory_space<vmem>>, %arg9: memref<128x1xf32, #tpu.memory_space<vmem>>, %arg10: memref<128x1xf32, #tpu.memory_space<vmem>>) attributes {dimension_semantics = [#tpu.dimension_semantics<parallel>, #tpu.dimension_semantics<arbitrary>], iteration_bounds = array<i64: 1, 1>, scalar_prefetch = 0 : i64, scratch_operands = 3 : i64, tpu.core_type = #tpu.core_type<tc>, window_params = [{transform_indices = @transform_0, window_bounds = array<i64: 128, 32>}, {transform_indices = @transform_1, window_bounds = array<i64: 128, 32>}, {transform_indices = @transform_2, window_bounds = array<i64: 128, 1>}, {transform_indices = @transform_3, window_bounds = array<i64: 1, 128>}, {transform_indices = @transform_4, window_bounds = array<i64: 128, 1>}, {transform_indices = @transform_5, window_bounds = array<i64: 128, 1>}]} {
    %c0_i32 = arith.constant 0 : i32
    %0 = arith.cmpi eq, %arg1, %c0_i32 : i32
    %1 = arith.extui %0 : i1 to i32
    %c0_i32_0 = arith.constant 0 : i32
    %2 = arith.cmpi ne, %1, %c0_i32_0 : i32
    scf.if %2 {
      %cst_22 = arith.constant -1.000000e+30 : f32
      %52 = vector.broadcast %cst_22 : f32 to vector<128x1xf32>
      %c0_23 = arith.constant 0 : index
      %c0_24 = arith.constant 0 : index
      %53 = vector.load %arg8[%c0_23, %c0_24] : memref<128x1xf32, #tpu.memory_space<vmem>>, vector<128x1xf32>
      tpu.vector_store %arg8[%c0_23, %c0_24], %52 {strides = array<i32>} : memref<128x1xf32, #tpu.memory_space<vmem>>, vector<128x1xf32>,
      %cst_25 = arith.constant 0.000000e+00 : f32
      %54 = vector.broadcast %cst_25 : f32 to vector<128x1xf32>
      %c0_26 = arith.constant 0 : index
      %c0_27 = arith.constant 0 : index
      %55 = vector.load %arg9[%c0_26, %c0_27] : memref<128x1xf32, #tpu.memory_space<vmem>>, vector<128x1xf32>
      tpu.vector_store %arg9[%c0_26, %c0_27], %54 {strides = array<i32>} : memref<128x1xf32, #tpu.memory_space<vmem>>, vector<128x1xf32>,
      %cst_28 = arith.constant 0.000000e+00 : f32
      %56 = vector.broadcast %cst_28 : f32 to vector<128x1xf32>
      %c0_29 = arith.constant 0 : index
      %c0_30 = arith.constant 0 : index
      %57 = vector.load %arg10[%c0_29, %c0_30] : memref<128x1xf32, #tpu.memory_space<vmem>>, vector<128x1xf32>
      tpu.vector_store %arg10[%c0_29, %c0_30], %56 {strides = array<i32>} : memref<128x1xf32, #tpu.memory_space<vmem>>, vector<128x1xf32>,
    } else {
    }
    %c0 = arith.constant 0 : index
    %c0_1 = arith.constant 0 : index
    %3 = vector.load %arg2[%c0, %c0_1] : memref<128x32xbf16, #tpu.memory_space<vmem>>, vector<128x32xbf16>
    %c0_2 = arith.constant 0 : index
    %c0_3 = arith.constant 0 : index
    %4 = vector.load %arg3[%c0_2, %c0_3] : memref<128x32xbf16, #tpu.memory_space<vmem>>, vector<128x32xbf16>
    %cst = arith.constant dense<0.000000e+00> : vector<128x128xf32>
    %5 = tpu.matmul %3, %4, %cst {dimension_numbers = #tpu.dot_dimension_numbers<[1], [1], [0], [0], [0, 0, 1, 0], [], []>} : vector<128x32xbf16>, vector<128x32xbf16>, vector<128x128xf32> -> vector<128x128xf32>
    %cst_4 = arith.constant 14.2857141 : f32
    %6 = vector.broadcast %cst_4 : f32 to vector<128x128xf32>
    %7 = arith.mulf %5, %6 : vector<128x128xf32>
    %c0_5 = arith.constant 0 : index
    %c0_6 = arith.constant 0 : index
    %8 = vector.load %arg4[%c0_5, %c0_6] : memref<128x1xi32, #tpu.memory_space<vmem>>, vector<128x1xi32>
    %c0_7 = arith.constant 0 : index
    %c0_8 = arith.constant 0 : index
    %9 = vector.load %arg5[%c0_7, %c0_8] : memref<1x128xi32, #tpu.memory_space<vmem>>, vector<1x128xi32>
    %10 = vector.broadcast %8 : vector<128x1xi32> to vector<128x128xi32>
    %11 = vector.broadcast %9 : vector<1x128xi32> to vector<128x128xi32>
    %12 = arith.cmpi eq, %10, %11 : vector<128x128xi32>
    %c128_i32 = arith.constant 128 : i32
    %13 = arith.muli %arg1, %c128_i32 : i32
    %14 = tpu.iota {dimensions = array<i32: 1>} : vector<1x128xi32>
    %15 = vector.broadcast %13 : i32 to vector<1x128xi32>
    %16 = arith.addi %15, %14 : vector<1x128xi32>
    %c16_i32 = arith.constant 16 : i32
    %17 = vector.broadcast %c16_i32 : i32 to vector<1x128xi32>
    %18 = arith.cmpi slt, %16, %17 : vector<1x128xi32>
    %cst_9 = arith.constant -1.000000e+30 : f32
    %19 = vector.shape_cast %18 : vector<1x128xi1> to vector<1x128xi1>
    %20 = vector.broadcast %19 : vector<1x128xi1> to vector<128x128xi1>
    %21 = vector.broadcast %cst_9 : f32 to vector<128x128xf32>
    %22 = arith.select %20, %7, %21 : vector<128x128xi1>, vector<128x128xf32>
    %23 = vector.broadcast %18 : vector<1x128xi1> to vector<128x128xi1>
    %24 = arith.andi %12, %23 : vector<128x128xi1>
    %25 = arith.extui %24 : vector<128x128xi1> to vector<128x128xi32>
    %26 = arith.sitofp %25 : vector<128x128xi32> to vector<128x128xf32>
    %c0_10 = arith.constant 0 : index
    %c0_11 = arith.constant 0 : index
    %27 = vector.load %arg8[%c0_10, %c0_11] : memref<128x1xf32, #tpu.memory_space<vmem>>, vector<128x1xf32>
    %cst_12 = arith.constant dense<0xFF800000> : vector<128xf32>
    %28 = vector.multi_reduction <maximumf>, %22, %cst_12 [1] : vector<128x128xf32> to vector<128xf32>
    %29 = vector.shape_cast %28 : vector<128xf32> to vector<128x1xf32>
    %30 = arith.maximumf %27, %29 : vector<128x1xf32>
    %31 = arith.subf %27, %30 : vector<128x1xf32>
    %32 = math.exp %31 : vector<128x1xf32>
    %33 = vector.broadcast %30 : vector<128x1xf32> to vector<128x128xf32>
    %34 = arith.subf %22, %33 : vector<128x128xf32>
    %35 = math.exp %34 : vector<128x128xf32>
    %c128_i32_13 = arith.constant 128 : i32
    %36 = arith.muli %arg1, %c128_i32_13 : i32
    %c128_i32_14 = arith.constant 128 : i32
    %37 = arith.muli %arg0, %c128_i32_14 : i32
    %38 = arith.cmpi sge, %36, %37 : i32
    %c1_i32 = arith.constant 1 : i32
    %39 = arith.addi %arg0, %c1_i32 : i32
    %c128_i32_15 = arith.constant 128 : i32
    %40 = arith.muli %39, %c128_i32_15 : i32
    %41 = arith.cmpi slt, %36, %40 : i32
    %42 = arith.andi %38, %41 : i1
    %43 = arith.extui %42 : i1 to i32
    %c0_i32_16 = arith.constant 0 : i32
    %44 = arith.cmpi ne, %43, %c0_i32_16 : i32
    scf.if %44 {
      %c128_i32_22 = arith.constant 128 : i32
      %52 = arith.muli %arg0, %c128_i32_22 : i32
      %53 = tpu.iota {dimensions = array<i32: 0>} : vector<128x128xi32>
      %54 = vector.broadcast %52 : i32 to vector<128x128xi32>
      %55 = arith.addi %54, %53 : vector<128x128xi32>
      %56 = tpu.iota {dimensions = array<i32: 1>} : vector<128x128xi32>
      %57 = vector.broadcast %36 : i32 to vector<128x128xi32>
      %58 = arith.addi %57, %56 : vector<128x128xi32>
      %59 = arith.cmpi ne, %55, %58 : vector<128x128xi32>
      %60 = arith.extui %59 : vector<128x128xi1> to vector<128x128xi32>
      %61 = arith.sitofp %60 : vector<128x128xi32> to vector<128x128xf32>
      %62 = arith.mulf %35, %61 : vector<128x128xf32>
      %63 = arith.mulf %26, %61 : vector<128x128xf32>
      %c0_23 = arith.constant 0 : index
      %c0_24 = arith.constant 0 : index
      %64 = vector.load %arg9[%c0_23, %c0_24] : memref<128x1xf32, #tpu.memory_space<vmem>>, vector<128x1xf32>
      %65 = arith.mulf %32, %64 : vector<128x1xf32>
      %cst_25 = arith.constant dense<0.000000e+00> : vector<128xf32>
      %66 = vector.multi_reduction <add>, %62, %cst_25 [1] : vector<128x128xf32> to vector<128xf32>
      %67 = vector.shape_cast %66 : vector<128xf32> to vector<128x1xf32>
      %68 = arith.addf %65, %67 : vector<128x1xf32>
      %c0_26 = arith.constant 0 : index
      %c0_27 = arith.constant 0 : index
      %69 = vector.load %arg9[%c0_26, %c0_27] : memref<128x1xf32, #tpu.memory_space<vmem>>, vector<128x1xf32>
      tpu.vector_store %arg9[%c0_26, %c0_27], %68 {strides = array<i32>} : memref<128x1xf32, #tpu.memory_space<vmem>>, vector<128x1xf32>,
      %c0_28 = arith.constant 0 : index
      %c0_29 = arith.constant 0 : index
      %70 = vector.load %arg10[%c0_28, %c0_29] : memref<128x1xf32, #tpu.memory_space<vmem>>, vector<128x1xf32>
      %71 = arith.mulf %63, %7 : vector<128x128xf32>
      %cst_30 = arith.constant dense<0.000000e+00> : vector<128xf32>
      %72 = vector.multi_reduction <add>, %71, %cst_30 [1] : vector<128x128xf32> to vector<128xf32>
      %73 = vector.shape_cast %72 : vector<128xf32> to vector<128x1xf32>
      %74 = arith.addf %70, %73 : vector<128x1xf32>
      %c0_31 = arith.constant 0 : index
      %c0_32 = arith.constant 0 : index
      %75 = vector.load %arg10[%c0_31, %c0_32] : memref<128x1xf32, #tpu.memory_space<vmem>>, vector<128x1xf32>
      tpu.vector_store %arg10[%c0_31, %c0_32], %74 {strides = array<i32>} : memref<128x1xf32, #tpu.memory_space<vmem>>, vector<128x1xf32>,
    } else {
    }
    %true = arith.constant true
    %45 = arith.xori %42, %true : i1
    %46 = arith.extui %45 : i1 to i32
    %c0_i32_17 = arith.constant 0 : i32
    %47 = arith.cmpi ne, %46, %c0_i32_17 : i32
    scf.if %47 {
      %c0_22 = arith.constant 0 : index
      %c0_23 = arith.constant 0 : index
      %52 = vector.load %arg9[%c0_22, %c0_23] : memref<128x1xf32, #tpu.memory_space<vmem>>, vector<128x1xf32>
      %53 = arith.mulf %32, %52 : vector<128x1xf32>
      %cst_24 = arith.constant dense<0.000000e+00> : vector<128xf32>
      %54 = vector.multi_reduction <add>, %35, %cst_24 [1] : vector<128x128xf32> to vector<128xf32>
      %55 = vector.shape_cast %54 : vector<128xf32> to vector<128x1xf32>
      %56 = arith.addf %53, %55 : vector<128x1xf32>
      %c0_25 = arith.constant 0 : index
      %c0_26 = arith.constant 0 : index
      %57 = vector.load %arg9[%c0_25, %c0_26] : memref<128x1xf32, #tpu.memory_space<vmem>>, vector<128x1xf32>
      tpu.vector_store %arg9[%c0_25, %c0_26], %56 {strides = array<i32>} : memref<128x1xf32, #tpu.memory_space<vmem>>, vector<128x1xf32>,
      %c0_27 = arith.constant 0 : index
      %c0_28 = arith.constant 0 : index
      %58 = vector.load %arg10[%c0_27, %c0_28] : memref<128x1xf32, #tpu.memory_space<vmem>>, vector<128x1xf32>
      %59 = arith.mulf %26, %7 : vector<128x128xf32>
      %cst_29 = arith.constant dense<0.000000e+00> : vector<128xf32>
      %60 = vector.multi_reduction <add>, %59, %cst_29 [1] : vector<128x128xf32> to vector<128xf32>
      %61 = vector.shape_cast %60 : vector<128xf32> to vector<128x1xf32>
      %62 = arith.addf %58, %61 : vector<128x1xf32>
      %c0_30 = arith.constant 0 : index
      %c0_31 = arith.constant 0 : index
      %63 = vector.load %arg10[%c0_30, %c0_31] : memref<128x1xf32, #tpu.memory_space<vmem>>, vector<128x1xf32>
      tpu.vector_store %arg10[%c0_30, %c0_31], %62 {strides = array<i32>} : memref<128x1xf32, #tpu.memory_space<vmem>>, vector<128x1xf32>,
    } else {
    }
    %c0_18 = arith.constant 0 : index
    %c0_19 = arith.constant 0 : index
    %48 = vector.load %arg8[%c0_18, %c0_19] : memref<128x1xf32, #tpu.memory_space<vmem>>, vector<128x1xf32>
    tpu.vector_store %arg8[%c0_18, %c0_19], %30 {strides = array<i32>} : memref<128x1xf32, #tpu.memory_space<vmem>>, vector<128x1xf32>,
    %c0_i32_20 = arith.constant 0 : i32
    %49 = arith.cmpi eq, %arg1, %c0_i32_20 : i32
    %50 = arith.extui %49 : i1 to i32
    %c0_i32_21 = arith.constant 0 : i32
    %51 = arith.cmpi ne, %50, %c0_i32_21 : i32
    scf.if %51 {
      %c0_22 = arith.constant 0 : index
      %c0_23 = arith.constant 0 : index
      %52 = vector.load %arg6[%c0_22, %c0_23] : memref<128x1xf32, #tpu.memory_space<vmem>>, vector<128x1xf32>
      %c0_24 = arith.constant 0 : index
      %c0_25 = arith.constant 0 : index
      %53 = vector.load %arg8[%c0_24, %c0_25] : memref<128x1xf32, #tpu.memory_space<vmem>>, vector<128x1xf32>
      %c0_26 = arith.constant 0 : index
      %c0_27 = arith.constant 0 : index
      %54 = vector.load %arg9[%c0_26, %c0_27] : memref<128x1xf32, #tpu.memory_space<vmem>>, vector<128x1xf32>
      %cst_28 = arith.constant 9.99999996E-13 : f32
      %55 = vector.broadcast %cst_28 : f32 to vector<128x1xf32>
      %56 = arith.addf %54, %55 : vector<128x1xf32>
      %57 = math.log %56 : vector<128x1xf32>
      %58 = arith.addf %53, %57 : vector<128x1xf32>
      %c0_29 = arith.constant 0 : index
      %c0_30 = arith.constant 0 : index
      %59 = vector.load %arg10[%c0_29, %c0_30] : memref<128x1xf32, #tpu.memory_space<vmem>>, vector<128x1xf32>
      %60 = arith.mulf %52, %58 : vector<128x1xf32>
      %61 = arith.subf %59, %60 : vector<128x1xf32>
      %cst_31 = arith.constant 9.99999996E-13 : f32
      %62 = vector.broadcast %cst_31 : f32 to vector<128x1xf32>
      %63 = arith.addf %52, %62 : vector<128x1xf32>
      %64 = arith.divf %61, %63 : vector<128x1xf32>
      %c0_32 = arith.constant 0 : index
      %c0_33 = arith.constant 0 : index
      %65 = vector.load %arg7[%c0_32, %c0_33] : memref<128x1xf32, #tpu.memory_space<vmem>>, vector<128x1xf32>
      tpu.vector_store %arg7[%c0_32, %c0_33], %64 {strides = array<i32>} : memref<128x1xf32, #tpu.memory_space<vmem>>, vector<128x1xf32>,
    } else {
    }
    return
  }
  func.func @transform_0(%arg0: i32, %arg1: i32) -> (i32, i32) {
    %c0_i32 = arith.constant 0 : i32
    %c0_i32_0 = arith.constant 0 : i32
    return %arg0, %c0_i32 : i32, i32
  }
  func.func @transform_1(%arg0: i32, %arg1: i32) -> (i32, i32) {
    %c0_i32 = arith.constant 0 : i32
    %c0_i32_0 = arith.constant 0 : i32
    return %arg1, %c0_i32 : i32, i32
  }
  func.func @transform_2(%arg0: i32, %arg1: i32) -> (i32, i32) {
    %c0_i32 = arith.constant 0 : i32
    %c0_i32_0 = arith.constant 0 : i32
    return %arg0, %c0_i32 : i32, i32
  }
  func.func @transform_3(%arg0: i32, %arg1: i32) -> (i32, i32) {
    %c0_i32 = arith.constant 0 : i32
    %c0_i32_0 = arith.constant 0 : i32
    return %c0_i32, %arg1 : i32, i32
  }
  func.func @transform_4(%arg0: i32, %arg1: i32) -> (i32, i32) {
    %c0_i32 = arith.constant 0 : i32
    %c0_i32_0 = arith.constant 0 : i32
    return %arg0, %c0_i32 : i32, i32
  }
  func.func @transform_5(%arg0: i32, %arg1: i32) -> (i32, i32) {
    %c0_i32 = arith.constant 0 : i32
    %c0_i32_0 = arith.constant 0 : i32
    return %arg0, %c0_i32 : i32, i32
  }
}

</mosaic_0001>

<llo_original>
// kernel: tpu_custom_call.1
$region0: #{tpu_custom_call.1}
  #allocation0 [shape = 'u32[]', space=smem, size = 0x4, offset = 0x4, fixed_abs, tag = 'smem constant byte address 0x4 - core index']
  #allocation1 [shape = 'u32[72,128]{1,0:T(1,128)}', space=vmem, size = 0x9000, scoped, tag = 'internal scratch']
  #allocation2 [shape = 'f32[128,1]{1,0:T(8,128)}', space=vmem, size = 0x10000, scoped, tag = 'scratch operand']
  #allocation3 [shape = 'f32[128,1]{1,0:T(8,128)}', space=vmem, size = 0x10000, scoped, tag = 'scratch operand']
  #allocation4 [shape = 'f32[128,1]{1,0:T(8,128)}', space=vmem, size = 0x10000, scoped, tag = 'scratch operand']
  %s0 = inlined_call_operand.vmem [shape: bf16[128,32], index: 0, kind: input, shape index: {}]
  %s1 = inlined_call_operand.vmem [shape: bf16[128,32], index: 1, kind: input, shape index: {}]
  %s2 = inlined_call_operand.vmem [shape: s32[128,1], index: 2, kind: input, shape index: {}]
  %s3 = inlined_call_operand.vmem [shape: s32[1,128], index: 3, kind: input, shape index: {}]
  %s4 = inlined_call_operand.vmem [shape: f32[128,1], index: 4, kind: input, shape index: {}]
  %s5 = inlined_call_operand.vmem [shape: f32[128,1], index: 5, kind: output, shape index: {}]
  %s6 = sld [smem:[#allocation0]]
  $region46: #{tpu_custom_call.1} parent=0
    _
  %s8 = ssub.s32 1, %s6
  %s9 = scalar_select 0, %s8, %s6
  // Predicated region
  $region2: #{tpu_custom_call.1} parent=0 // pred_check
    _
  $region3: #{tpu_custom_call.1} parent=0 // pred_check_branch
    %11 = sbr.rel (0) target = $region5
  $region4: #{tpu_custom_call.1} parent=0 // pred_region
    _
  $region5: #{tpu_custom_call.1} parent=0 // pred_fallthru
    _
  // Predicated region
  $region6: #{tpu_custom_call.1} parent=0 // pred_check
    _
  $region7: #{tpu_custom_call.1} parent=0 // pred_check_branch
    %13 = sbr.rel (0) target = $region9
  $region8: #{tpu_custom_call.1} parent=0 // pred_region
    _
  $region9: #{tpu_custom_call.1} parent=0 // pred_fallthru
    _
  // Predicated region
  $region10: #{tpu_custom_call.1} parent=0 // pred_check
    _
  $region11: #{tpu_custom_call.1} parent=0 // pred_check_branch
    %15 = sbr.rel (0) target = $region13
  $region12: #{tpu_custom_call.1} parent=0 // pred_region
    _
  $region13: #{tpu_custom_call.1} parent=0 // pred_fallthru
    _
  // Predicated region
  $region14: #{tpu_custom_call.1} parent=0 // pred_check
    _
  $region15: #{tpu_custom_call.1} parent=0 // pred_check_branch
    %17 = sbr.rel (0) target = $region17
  $region16: #{tpu_custom_call.1} parent=0 // pred_region
    _
  $region17: #{tpu_custom_call.1} parent=0 // pred_fallthru
    _
  // Predicated region
  $region18: #{tpu_custom_call.1} parent=0 // pred_check
    _
  $region19: #{tpu_custom_call.1} parent=0 // pred_check_branch
    %19 = sbr.rel (0) target = $region21
  $region20: #{tpu_custom_call.1} parent=0 // pred_region
    _
  $region21: #{tpu_custom_call.1} parent=0 // pred_fallthru
    _
  %p20 = scmp.eq.s32.totalorder 0, 0
  // Predicated region
  $region22: #{tpu_custom_call.1} parent=0 // pred_check
    %p21 = pneg %p20
  $region23: #{tpu_custom_call.1} parent=0 // pred_check_branch
    %23 = sbr.rel (%p21) target = $region25
  $region24: #{tpu_custom_call.1} parent=0 // pred_region
    %vm24 = vcmask 7168
    %25 = vst.msk [vmem:[#allocation2] sm:$0xff] %vm24, -1e+30
    %26 = vst.msk [vmem:[#allocation2 + $0x8] sm:$0xff] %vm24, -1e+30
    %27 = vst.msk [vmem:[#allocation2 + $0x10] sm:$0xff] %vm24, -1e+30
    %28 = vst.msk [vmem:[#allocation2 + $0x18] sm:$0xff] %vm24, -1e+30
    %29 = vst.msk [vmem:[#allocation2 + $0x20] sm:$0xff] %vm24, -1e+30
    %30 = vst.msk [vmem:[#allocation2 + $0x28] sm:$0xff] %vm24, -1e+30
    %31 = vst.msk [vmem:[#allocation2 + $0x30] sm:$0xff] %vm24, -1e+30
    %32 = vst.msk [vmem:[#allocation2 + $0x38] sm:$0xff] %vm24, -1e+30
    %33 = vst.msk [vmem:[#allocation2 + $0x40] sm:$0xff] %vm24, -1e+30
    %34 = vst.msk [vmem:[#allocation2 + $0x48] sm:$0xff] %vm24, -1e+30
    %35 = vst.msk [vmem:[#allocation2 + $0x50] sm:$0xff] %vm24, -1e+30
    %36 = vst.msk [vmem:[#allocation2 + $0x58] sm:$0xff] %vm24, -1e+30
    %37 = vst.msk [vmem:[#allocation2 + $0x60] sm:$0xff] %vm24, -1e+30
    %38 = vst.msk [vmem:[#allocation2 + $0x68] sm:$0xff] %vm24, -1e+30
    %39 = vst.msk [vmem:[#allocation2 + $0x70] sm:$0xff] %vm24, -1e+30
    %40 = vst.msk [vmem:[#allocation2 + $0x78] sm:$0xff] %vm24, -1e+30
    %41 = vst.msk [vmem:[#allocation3] sm:$0xff] %vm24, 0.0
    %42 = vst.msk [vmem:[#allocation3 + $0x8] sm:$0xff] %vm24, 0.0
    %43 = vst.msk [vmem:[#allocation3 + $0x10] sm:$0xff] %vm24, 0.0
    %44 = vst.msk [vmem:[#allocation3 + $0x18] sm:$0xff] %vm24, 0.0
    %45 = vst.msk [vmem:[#allocation3 + $0x20] sm:$0xff] %vm24, 0.0
    %46 = vst.msk [vmem:[#allocation3 + $0x28] sm:$0xff] %vm24, 0.0
    %47 = vst.msk [vmem:[#allocation3 + $0x30] sm:$0xff] %vm24, 0.0
    %48 = vst.msk [vmem:[#allocation3 + $0x38] sm:$0xff] %vm24, 0.0
    %49 = vst.msk [vmem:[#allocation3 + $0x40] sm:$0xff] %vm24, 0.0
    %50 = vst.msk [vmem:[#allocation3 + $0x48] sm:$0xff] %vm24, 0.0
    %51 = vst.msk [vmem:[#allocation3 + $0x50] sm:$0xff] %vm24, 0.0
    %52 = vst.msk [vmem:[#allocation3 + $0x58] sm:$0xff] %vm24, 0.0
    %53 = vst.msk [vmem:[#allocation3 + $0x60] sm:$0xff] %vm24, 0.0
    %54 = vst.msk [vmem:[#allocation3 + $0x68] sm:$0xff] %vm24, 0.0
    %55 = vst.msk [vmem:[#allocation3 + $0x70] sm:$0xff] %vm24, 0.0
    %56 = vst.msk [vmem:[#allocation3 + $0x78] sm:$0xff] %vm24, 0.0
    %57 = vst.msk [vmem:[#allocation4] sm:$0xff] %vm24, 0.0
    %58 = vst.msk [vmem:[#allocation4 + $0x8] sm:$0xff] %vm24, 0.0
    %59 = vst.msk [vmem:[#allocation4 + $0x10] sm:$0xff] %vm24, 0.0
    %60 = vst.msk [vmem:[#allocation4 + $0x18] sm:$0xff] %vm24, 0.0
    %61 = vst.msk [vmem:[#allocation4 + $0x20] sm:$0xff] %vm24, 0.0
    %62 = vst.msk [vmem:[#allocation4 + $0x28] sm:$0xff] %vm24, 0.0
    %63 = vst.msk [vmem:[#allocation4 + $0x30] sm:$0xff] %vm24, 0.0
    %64 = vst.msk [vmem:[#allocation4 + $0x38] sm:$0xff] %vm24, 0.0
    %65 = vst.msk [vmem:[#allocation4 + $0x40] sm:$0xff] %vm24, 0.0
    %66 = vst.msk [vmem:[#allocation4 + $0x48] sm:$0xff] %vm24, 0.0
    %67 = vst.msk [vmem:[#allocation4 + $0x50] sm:$0xff] %vm24, 0.0
    %68 = vst.msk [vmem:[#allocation4 + $0x58] sm:$0xff] %vm24, 0.0
    %69 = vst.msk [vmem:[#allocation4 + $0x60] sm:$0xff] %vm24, 0.0
    %70 = vst.msk [vmem:[#allocation4 + $0x68] sm:$0xff] %vm24, 0.0
    %71 = vst.msk [vmem:[#allocation4 + $0x70] sm:$0xff] %vm24, 0.0
    %72 = vst.msk [vmem:[#allocation4 + $0x78] sm:$0xff] %vm24, 0.0
  $region25: #{tpu_custom_call.1} parent=0 // pred_fallthru
    _
  %v73 = vld [vmem:[%s0] sm:$0xf]
  %v74 = vld [vmem:[%s0 + $0x4] sm:$0xf]
  %v75 = vld [vmem:[%s0 + $0x8] sm:$0xf]
  %v76 = vld [vmem:[%s0 + $0xc] sm:$0xf]
  %v77 = vld [vmem:[%s0 + $0x10] sm:$0xf]
  %v78 = vld [vmem:[%s0 + $0x14] sm:$0xf]
  %v79 = vld [vmem:[%s0 + $0x18] sm:$0xf]
  %v80 = vld [vmem:[%s0 + $0x1c] sm:$0xf]
  %v81 = vld [vmem:[%s0 + $0x20] sm:$0xf]
  %v82 = vld [vmem:[%s0 + $0x24] sm:$0xf]
  %v83 = vld [vmem:[%s0 + $0x28] sm:$0xf]
  %v84 = vld [vmem:[%s0 + $0x2c] sm:$0xf]
  %v85 = vld [vmem:[%s0 + $0x30] sm:$0xf]
  %v86 = vld [vmem:[%s0 + $0x34] sm:$0xf]
  %v87 = vld [vmem:[%s0 + $0x38] sm:$0xf]
  %v88 = vld [vmem:[%s0 + $0x3c] sm:$0xf]
  %v89 = vld [vmem:[%s1] sm:$0xf]
  %v90 = vld [vmem:[%s1 + $0x4] sm:$0xf]
  %v91 = vld [vmem:[%s1 + $0x8] sm:$0xf]
  %v92 = vld [vmem:[%s1 + $0xc] sm:$0xf]
  %v93 = vld [vmem:[%s1 + $0x10] sm:$0xf]
  %v94 = vld [vmem:[%s1 + $0x14] sm:$0xf]
  %v95 = vld [vmem:[%s1 + $0x18] sm:$0xf]
  %v96 = vld [vmem:[%s1 + $0x1c] sm:$0xf]
  %v97 = vld [vmem:[%s1 + $0x20] sm:$0xf]
  %v98 = vld [vmem:[%s1 + $0x24] sm:$0xf]
  %v99 = vld [vmem:[%s1 + $0x28] sm:$0xf]
  %v100 = vld [vmem:[%s1 + $0x2c] sm:$0xf]
  %v101 = vld [vmem:[%s1 + $0x30] sm:$0xf]
  %v102 = vld [vmem:[%s1 + $0x34] sm:$0xf]
  %v103 = vld [vmem:[%s1 + $0x38] sm:$0xf]
  %v104 = vld [vmem:[%s1 + $0x3c] sm:$0xf]
  %v121 = vunpack.c.l.b16 %v73
  %v122 = vunpack.c.l.b16 %v74
  %v123 = vunpack.c.l.b16 %v75
  %v124 = vunpack.c.l.b16 %v76
  %v125 = vunpack.c.l.b16 %v77
  %v126 = vunpack.c.l.b16 %v78
  %v127 = vunpack.c.l.b16 %v79
  %v128 = vunpack.c.l.b16 %v80
  %v129 = vunpack.c.l.b16 %v81
  %v130 = vunpack.c.l.b16 %v82
  %v131 = vunpack.c.l.b16 %v83
  %v132 = vunpack.c.l.b16 %v84
  %v133 = vunpack.c.l.b16 %v85
  %v134 = vunpack.c.l.b16 %v86
  %v135 = vunpack.c.l.b16 %v87
  %v136 = vunpack.c.l.b16 %v88
  %v137 = vpack.c.b16 %v122, %v121
  %v138 = vpack.c.b16 %v124, %v123
  %v139 = vpack.c.b16 %v126, %v125
  %v140 = vpack.c.b16 %v128, %v127
  %v141 = vpack.c.b16 %v130, %v129
  %v142 = vpack.c.b16 %v132, %v131
  %v143 = vpack.c.b16 %v134, %v133
  %v144 = vpack.c.b16 %v136, %v135
  %v161 = vunpack.c.l.b16 %v89
  %v162 = vunpack.c.l.b16 %v90
  %v163 = vunpack.c.l.b16 %v91
  %v164 = vunpack.c.l.b16 %v92
  %v165 = vunpack.c.l.b16 %v93
  %v166 = vunpack.c.l.b16 %v94
  %v167 = vunpack.c.l.b16 %v95
  %v168 = vunpack.c.l.b16 %v96
  %v169 = vunpack.c.l.b16 %v97
  %v170 = vunpack.c.l.b16 %v98
  %v171 = vunpack.c.l.b16 %v99
  %v172 = vunpack.c.l.b16 %v100
  %v173 = vunpack.c.l.b16 %v101
  %v174 = vunpack.c.l.b16 %v102
  %v175 = vunpack.c.l.b16 %v103
  %v176 = vunpack.c.l.b16 %v104
  %v177 = vpack.c.b16 %v162, %v161
  %v178 = vpack.c.b16 %v164, %v163
  %v179 = vpack.c.b16 %v166, %v165
  %v180 = vpack.c.b16 %v168, %v167
  %v181 = vpack.c.b16 %v170, %v169
  %v182 = vpack.c.b16 %v172, %v171
  %v183 = vpack.c.b16 %v174, %v173
  %v184 = vpack.c.b16 %v176, %v175
  %vm185 = vcmask 261120
  %v187 = vsel %vm185, %v137, 0
  %v190 = vsel %vm185, %v138, 0
  %v193 = vsel %vm185, %v139, 0
  %v196 = vsel %vm185, %v140, 0
  %v199 = vsel %vm185, %v141, 0
  %v202 = vsel %vm185, %v142, 0
  %v205 = vsel %vm185, %v143, 0
  %v208 = vsel %vm185, %v144, 0
  %v211 = vsel %vm185, %v177, 0
  %v214 = vsel %vm185, %v178, 0
  %v217 = vsel %vm185, %v179, 0
  %v220 = vsel %vm185, %v180, 0
  %v223 = vsel %vm185, %v181, 0
  %v226 = vsel %vm185, %v182, 0
  %v229 = vsel %vm185, %v183, 0
  %v232 = vsel %vm185, %v184, 0
  %234 = vmatpush.bf16.xpose.msra.mxu0 %v232
  %235 = vmatpush.bf16.xpose.msra.mxu0 %v229
  %236 = vmatpush.bf16.xpose.msra.mxu0 %v226
  %237 = vmatpush.bf16.xpose.msra.mxu0 %v223
  %238 = vmatpush.bf16.xpose.msra.mxu0 %v220
  %239 = vmatpush.bf16.xpose.msra.mxu0 %v217
  %240 = vmatpush.bf16.xpose.msra.mxu0 %v214
  %241 = vmatpush.bf16.xpose.msra.mxu0 %v211
  %242 = vmatmul.bf16.gmra.mxu0 %v187
  %v243 = vpop.f32.mrf.mxu0
  %v244 = vadd.f32 0.0, %v243
  %v245 = vpop.f32.mrf.mxu0
  %v246 = vadd.f32 0.0, %v245
  %247 = vmatmul.bf16.gmra.mxu0 %v190
  %v248 = vpop.f32.mrf.mxu0
  %v249 = vadd.f32 0.0, %v248
  %v250 = vpop.f32.mrf.mxu0
  %v251 = vadd.f32 0.0, %v250
  %252 = vmatmul.bf16.gmra.mxu0 %v193
  %v253 = vpop.f32.mrf.mxu0
  %v254 = vadd.f32 0.0, %v253
  %v255 = vpop.f32.mrf.mxu0
  %v256 = vadd.f32 0.0, %v255
  %257 = vmatmul.bf16.gmra.mxu0 %v196
  %v258 = vpop.f32.mrf.mxu0
  %v259 = vadd.f32 0.0, %v258
  %v260 = vpop.f32.mrf.mxu0
  %v261 = vadd.f32 0.0, %v260
  %262 = vmatmul.bf16.gmra.mxu0 %v199
  %v263 = vpop.f32.mrf.mxu0
  %v264 = vadd.f32 0.0, %v263
  %v265 = vpop.f32.mrf.mxu0
  %v266 = vadd.f32 0.0, %v265
  %267 = vmatmul.bf16.gmra.mxu0 %v202
  %v268 = vpop.f32.mrf.mxu0
  %v269 = vadd.f32 0.0, %v268
  %v270 = vpop.f32.mrf.mxu0
  %v271 = vadd.f32 0.0, %v270
  %272 = vmatmul.bf16.gmra.mxu0 %v205
  %v273 = vpop.f32.mrf.mxu0
  %v274 = vadd.f32 0.0, %v273
  %v275 = vpop.f32.mrf.mxu0
  %v276 = vadd.f32 0.0, %v275
  %277 = vmatmul.bf16.gmra.mxu0 %v208
  %v278 = vpop.f32.mrf.mxu0
  %v279 = vadd.f32 0.0, %v278
  %v280 = vpop.f32.mrf.mxu0
  %v281 = vadd.f32 0.0, %v280
  %282 = vdwg.mxu0
  %v283 = vmul.f32 %v244, 14.285714
  %v284 = vmul.f32 %v246, 14.285714
  %v285 = vmul.f32 %v249, 14.285714
  %v286 = vmul.f32 %v251, 14.285714
  %v287 = vmul.f32 %v254, 14.285714
  %v288 = vmul.f32 %v256, 14.285714
  %v289 = vmul.f32 %v259, 14.285714
  %v290 = vmul.f32 %v261, 14.285714
  %v291 = vmul.f32 %v264, 14.285714
  %v292 = vmul.f32 %v266, 14.285714
  %v293 = vmul.f32 %v269, 14.285714
  %v294 = vmul.f32 %v271, 14.285714
  %v295 = vmul.f32 %v274, 14.285714
  %v296 = vmul.f32 %v276, 14.285714
  %v297 = vmul.f32 %v279, 14.285714
  %v298 = vmul.f32 %v281, 14.285714
  %v299 = vld [vmem:[%s2] sm:$0xff]
  %v300 = vld [vmem:[%s2 + $0x8] sm:$0xff]
  %v301 = vld [vmem:[%s2 + $0x10] sm:$0xff]
  %v302 = vld [vmem:[%s2 + $0x18] sm:$0xff]
  %v303 = vld [vmem:[%s2 + $0x20] sm:$0xff]
  %v304 = vld [vmem:[%s2 + $0x28] sm:$0xff]
  %v305 = vld [vmem:[%s2 + $0x30] sm:$0xff]
  %v306 = vld [vmem:[%s2 + $0x38] sm:$0xff]
  %v307 = vld [vmem:[%s2 + $0x40] sm:$0xff]
  %v308 = vld [vmem:[%s2 + $0x48] sm:$0xff]
  %v309 = vld [vmem:[%s2 + $0x50] sm:$0xff]
  %v310 = vld [vmem:[%s2 + $0x58] sm:$0xff]
  %v311 = vld [vmem:[%s2 + $0x60] sm:$0xff]
  %v312 = vld [vmem:[%s2 + $0x68] sm:$0xff]
  %v313 = vld [vmem:[%s2 + $0x70] sm:$0xff]
  %v314 = vld [vmem:[%s2 + $0x78] sm:$0xff]
  %v315 = vld [vmem:[%s3] sm:$0x1]
  %316 = vset.pattern.permute.xlu0 0
  %317 = vperm.xlu0 %316, %v299
  %v318 = vpop.permute.xlu0 %317
  %319 = vset.pattern.permute.xlu0 0
  %320 = vperm.xlu0 %319, %v300
  %v321 = vpop.permute.xlu0 %320
  %322 = vset.pattern.permute.xlu0 0
  %323 = vperm.xlu0 %322, %v301
  %v324 = vpop.permute.xlu0 %323
  %325 = vset.pattern.permute.xlu0 0
  %326 = vperm.xlu0 %325, %v302
  %v327 = vpop.permute.xlu0 %326
  %328 = vset.pattern.permute.xlu0 0
  %329 = vperm.xlu0 %328, %v303
  %v330 = vpop.permute.xlu0 %329
  %331 = vset.pattern.permute.xlu0 0
  %332 = vperm.xlu0 %331, %v304
  %v333 = vpop.permute.xlu0 %332
  %334 = vset.pattern.permute.xlu0 0
  %335 = vperm.xlu0 %334, %v305
  %v336 = vpop.permute.xlu0 %335
  %337 = vset.pattern.permute.xlu0 0
  %338 = vperm.xlu0 %337, %v306
  %v339 = vpop.permute.xlu0 %338
  %340 = vset.pattern.permute.xlu0 0
  %341 = vperm.xlu0 %340, %v307
  %v342 = vpop.permute.xlu0 %341
  %343 = vset.pattern.permute.xlu0 0
  %344 = vperm.xlu0 %343, %v308
  %v345 = vpop.permute.xlu0 %344
  %346 = vset.pattern.permute.xlu0 0
  %347 = vperm.xlu0 %346, %v309
  %v348 = vpop.permute.xlu0 %347
  %349 = vset.pattern.permute.xlu0 0
  %350 = vperm.xlu0 %349, %v310
  %v351 = vpop.permute.xlu0 %350
  %352 = vset.pattern.permute.xlu0 0
  %353 = vperm.xlu0 %352, %v311
  %v354 = vpop.permute.xlu0 %353
  %355 = vset.pattern.permute.xlu0 0
  %356 = vperm.xlu0 %355, %v312
  %v357 = vpop.permute.xlu0 %356
  %358 = vset.pattern.permute.xlu0 0
  %359 = vperm.xlu0 %358, %v313
  %v360 = vpop.permute.xlu0 %359
  %361 = vset.pattern.permute.xlu0 0
  %362 = vperm.xlu0 %361, %v314
  %v363 = vpop.permute.xlu0 %362
  %v364 = vperm.slane %v315, 0
  %vm365 = vcmp.eq.s32.totalorder %v318, %v364
  %vm366 = vcmp.eq.s32.totalorder %v321, %v364
  %vm367 = vcmp.eq.s32.totalorder %v324, %v364
  %vm368 = vcmp.eq.s32.totalorder %v327, %v364
  %vm369 = vcmp.eq.s32.totalorder %v330, %v364
  %vm370 = vcmp.eq.s32.totalorder %v333, %v364
  %vm371 = vcmp.eq.s32.totalorder %v336, %v364
  %vm372 = vcmp.eq.s32.totalorder %v339, %v364
  %vm373 = vcmp.eq.s32.totalorder %v342, %v364
  %vm374 = vcmp.eq.s32.totalorder %v345, %v364
  %vm375 = vcmp.eq.s32.totalorder %v348, %v364
  %vm376 = vcmp.eq.s32.totalorder %v351, %v364
  %vm377 = vcmp.eq.s32.totalorder %v354, %v364
  %vm378 = vcmp.eq.s32.totalorder %v357, %v364
  %vm379 = vcmp.eq.s32.totalorder %v360, %v364
  %vm380 = vcmp.eq.s32.totalorder %v363, %v364
  %s381 = smul.u32 0, 128
  %v382 = vlaneseq
  %v383 = vand.u32 %v382, 127
  %v384 = vstv %s381
  %v385 = vadd.s32 %v384, %v383
  %vm386 = vcmp.lt.s32.totalorder %v385, 16
  %v387 = vsel %vm386, 1, 0
  %vm388 = vcmp.eq.s32.totalorder %v387, 1
  %v389 = vsel %vm388, %v283, -1e+30
  %v390 = vsel %vm388, %v284, -1e+30
  %v391 = vsel %vm388, %v285, -1e+30
  %v392 = vsel %vm388, %v286, -1e+30
  %v393 = vsel %vm388, %v287, -1e+30
  %v394 = vsel %vm388, %v288, -1e+30
  %v395 = vsel %vm388, %v289, -1e+30
  %v396 = vsel %vm388, %v290, -1e+30
  %v397 = vsel %vm388, %v291, -1e+30
  %v398 = vsel %vm388, %v292, -1e+30
  %v399 = vsel %vm388, %v293, -1e+30
  %v400 = vsel %vm388, %v294, -1e+30
  %v401 = vsel %vm388, %v295, -1e+30
  %v402 = vsel %vm388, %v296, -1e+30
  %v403 = vsel %vm388, %v297, -1e+30
  %v404 = vsel %vm388, %v298, -1e+30
  %vm405 = vmand %vm365, %vm388
  %vm406 = vmand %vm366, %vm388
  %vm407 = vmand %vm367, %vm388
  %vm408 = vmand %vm368, %vm388
  %vm409 = vmand %vm369, %vm388
  %vm410 = vmand %vm370, %vm388
  %vm411 = vmand %vm371, %vm388
  %vm412 = vmand %vm372, %vm388
  %vm413 = vmand %vm373, %vm388
  %vm414 = vmand %vm374, %vm388
  %vm415 = vmand %vm375, %vm388
  %vm416 = vmand %vm376, %vm388
  %vm417 = vmand %vm377, %vm388
  %vm418 = vmand %vm378, %vm388
  %vm419 = vmand %vm379, %vm388
  %vm420 = vmand %vm380, %vm388
  %v421 = vsel %vm405, 1, 0
  %v422 = vsel %vm406, 1, 0
  %v423 = vsel %vm407, 1, 0
  %v424 = vsel %vm408, 1, 0
  %v425 = vsel %vm409, 1, 0
  %v426 = vsel %vm410, 1, 0
  %v427 = vsel %vm411, 1, 0
  %v428 = vsel %vm412, 1, 0
  %v429 = vsel %vm413, 1, 0
  %v430 = vsel %vm414, 1, 0
  %v431 = vsel %vm415, 1, 0
  %v432 = vsel %vm416, 1, 0
  %v433 = vsel %vm417, 1, 0
  %v434 = vsel %vm418, 1, 0
  %v435 = vsel %vm419, 1, 0
  %v436 = vsel %vm420, 1, 0
  %v437 = vcvt.s32.f32 %v421
  %v438 = vcvt.s32.f32 %v422
  %v439 = vcvt.s32.f32 %v423
  %v440 = vcvt.s32.f32 %v424
  %v441 = vcvt.s32.f32 %v425
  %v442 = vcvt.s32.f32 %v426
  %v443 = vcvt.s32.f32 %v427
  %v444 = vcvt.s32.f32 %v428
  %v445 = vcvt.s32.f32 %v429
  %v446 = vcvt.s32.f32 %v430
  %v447 = vcvt.s32.f32 %v431
  %v448 = vcvt.s32.f32 %v432
  %v449 = vcvt.s32.f32 %v433
  %v450 = vcvt.s32.f32 %v434
  %v451 = vcvt.s32.f32 %v435
  %v452 = vcvt.s32.f32 %v436
  %v453 = vld [vmem:[#allocation2] sm:$0xff]
  %v454 = vld [vmem:[#allocation2 + $0x8] sm:$0xff]
  %v455 = vld [vmem:[#allocation2 + $0x10] sm:$0xff]
  %v456 = vld [vmem:[#allocation2 + $0x18] sm:$0xff]
  %v457 = vld [vmem:[#allocation2 + $0x20] sm:$0xff]
  %v458 = vld [vmem:[#allocation2 + $0x28] sm:$0xff]
  %v459 = vld [vmem:[#allocation2 + $0x30] sm:$0xff]
  %v460 = vld [vmem:[#allocation2 + $0x38] sm:$0xff]
  %v461 = vld [vmem:[#allocation2 + $0x40] sm:$0xff]
  %v462 = vld [vmem:[#allocation2 + $0x48] sm:$0xff]
  %v463 = vld [vmem:[#allocation2 + $0x50] sm:$0xff]
  %v464 = vld [vmem:[#allocation2 + $0x58] sm:$0xff]
  %v465 = vld [vmem:[#allocation2 + $0x60] sm:$0xff]
  %v466 = vld [vmem:[#allocation2 + $0x68] sm:$0xff]
  %v467 = vld [vmem:[#allocation2 + $0x70] sm:$0xff]
  %v468 = vld [vmem:[#allocation2 + $0x78] sm:$0xff]
  %469 = vmax.xlane.f32.xlu0 %v389
  %v470 = vpop.xlane.xlu0 %469
  %471 = vmax.xlane.f32.xlu0 %v390
  %v472 = vpop.xlane.xlu0 %471
  %473 = vmax.xlane.f32.xlu0 %v391
  %v474 = vpop.xlane.xlu0 %473
  %475 = vmax.xlane.f32.xlu0 %v392
  %v476 = vpop.xlane.xlu0 %475
  %477 = vmax.xlane.f32.xlu0 %v393
  %v478 = vpop.xlane.xlu0 %477
  %479 = vmax.xlane.f32.xlu0 %v394
  %v480 = vpop.xlane.xlu0 %479
  %481 = vmax.xlane.f32.xlu0 %v395
  %v482 = vpop.xlane.xlu0 %481
  %483 = vmax.xlane.f32.xlu0 %v396
  %v484 = vpop.xlane.xlu0 %483
  %485 = vmax.xlane.f32.xlu0 %v397
  %v486 = vpop.xlane.xlu0 %485
  %487 = vmax.xlane.f32.xlu0 %v398
  %v488 = vpop.xlane.xlu0 %487
  %489 = vmax.xlane.f32.xlu0 %v399
  %v490 = vpop.xlane.xlu0 %489
  %491 = vmax.xlane.f32.xlu0 %v400
  %v492 = vpop.xlane.xlu0 %491
  %493 = vmax.xlane.f32.xlu0 %v401
  %v494 = vpop.xlane.xlu0 %493
  %495 = vmax.xlane.f32.xlu0 %v402
  %v496 = vpop.xlane.xlu0 %495
  %497 = vmax.xlane.f32.xlu0 %v403
  %v498 = vpop.xlane.xlu0 %497
  %499 = vmax.xlane.f32.xlu0 %v404
  %v500 = vpop.xlane.xlu0 %499
  %v501 = vmax.f32 %v453, %v470
  %v502 = vmax.f32 %v454, %v472
  %v503 = vmax.f32 %v455, %v474
  %v504 = vmax.f32 %v456, %v476
  %v505 = vmax.f32 %v457, %v478
  %v506 = vmax.f32 %v458, %v480
  %v507 = vmax.f32 %v459, %v482
  %v508 = vmax.f32 %v460, %v484
  %v509 = vmax.f32 %v461, %v486
  %v510 = vmax.f32 %v462, %v488
  %v511 = vmax.f32 %v463, %v490
  %v512 = vmax.f32 %v464, %v492
  %v513 = vmax.f32 %v465, %v494
  %v514 = vmax.f32 %v466, %v496
  %v515 = vmax.f32 %v467, %v498
  %v516 = vmax.f32 %v468, %v500
  %v517 = vsub.f32 %v453, %v501
  %v518 = vsub.f32 %v454, %v502
  %v519 = vsub.f32 %v455, %v503
  %v520 = vsub.f32 %v456, %v504
  %v521 = vsub.f32 %v457, %v505
  %v522 = vsub.f32 %v458, %v506
  %v523 = vsub.f32 %v459, %v507
  %v524 = vsub.f32 %v460, %v508
  %v525 = vsub.f32 %v461, %v509
  %v526 = vsub.f32 %v462, %v510
  %v527 = vsub.f32 %v463, %v511
  %v528 = vsub.f32 %v464, %v512
  %v529 = vsub.f32 %v465, %v513
  %v530 = vsub.f32 %v466, %v514
  %v531 = vsub.f32 %v467, %v515
  %v532 = vsub.f32 %v468, %v516
  %v533 = vmul.f32 %v517, 1.442695
  %v534 = vpow.pop %v533
  %v535 = vmul.f32 %v518, 1.442695
  %v536 = vpow.pop %v535
  %v537 = vmul.f32 %v519, 1.442695
  %v538 = vpow.pop %v537
  %v539 = vmul.f32 %v520, 1.442695
  %v540 = vpow.pop %v539
  %v541 = vmul.f32 %v521, 1.442695
  %v542 = vpow.pop %v541
  %v543 = vmul.f32 %v522, 1.442695
  %v544 = vpow.pop %v543
  %v545 = vmul.f32 %v523, 1.442695
  %v546 = vpow.pop %v545
  %v547 = vmul.f32 %v524, 1.442695
  %v548 = vpow.pop %v547
  %v549 = vmul.f32 %v525, 1.442695
  %v550 = vpow.pop %v549
  %v551 = vmul.f32 %v526, 1.442695
  %v552 = vpow.pop %v551
  %v553 = vmul.f32 %v527, 1.442695
  %v554 = vpow.pop %v553
  %v555 = vmul.f32 %v528, 1.442695
  %v556 = vpow.pop %v555
  %v557 = vmul.f32 %v529, 1.442695
  %v558 = vpow.pop %v557
  %v559 = vmul.f32 %v530, 1.442695
  %v560 = vpow.pop %v559
  %v561 = vmul.f32 %v531, 1.442695
  %v562 = vpow.pop %v561
  %v563 = vmul.f32 %v532, 1.442695
  %v564 = vpow.pop %v563
  %566 = vset.pattern.permute.xlu0 0
  %567 = vperm.xlu0 %566, %v501
  %v568 = vpop.permute.xlu0 %567
  %571 = vset.pattern.permute.xlu0 0
  %572 = vperm.xlu0 %571, %v502
  %v573 = vpop.permute.xlu0 %572
  %576 = vset.pattern.permute.xlu0 0
  %577 = vperm.xlu0 %576, %v503
  %v578 = vpop.permute.xlu0 %577
  %581 = vset.pattern.permute.xlu0 0
  %582 = vperm.xlu0 %581, %v504
  %v583 = vpop.permute.xlu0 %582
  %586 = vset.pattern.permute.xlu0 0
  %587 = vperm.xlu0 %586, %v505
  %v588 = vpop.permute.xlu0 %587
  %591 = vset.pattern.permute.xlu0 0
  %592 = vperm.xlu0 %591, %v506
  %v593 = vpop.permute.xlu0 %592
  %596 = vset.pattern.permute.xlu0 0
  %597 = vperm.xlu0 %596, %v507
  %v598 = vpop.permute.xlu0 %597
  %601 = vset.pattern.permute.xlu0 0
  %602 = vperm.xlu0 %601, %v508
  %v603 = vpop.permute.xlu0 %602
  %606 = vset.pattern.permute.xlu0 0
  %607 = vperm.xlu0 %606, %v509
  %v608 = vpop.permute.xlu0 %607
  %611 = vset.pattern.permute.xlu0 0
  %612 = vperm.xlu0 %611, %v510
  %v613 = vpop.permute.xlu0 %612
  %616 = vset.pattern.permute.xlu0 0
  %617 = vperm.xlu0 %616, %v511
  %v618 = vpop.permute.xlu0 %617
  %621 = vset.pattern.permute.xlu0 0
  %622 = vperm.xlu0 %621, %v512
  %v623 = vpop.permute.xlu0 %622
  %626 = vset.pattern.permute.xlu0 0
  %627 = vperm.xlu0 %626, %v513
  %v628 = vpop.permute.xlu0 %627
  %631 = vset.pattern.permute.xlu0 0
  %632 = vperm.xlu0 %631, %v514
  %v633 = vpop.permute.xlu0 %632
  %636 = vset.pattern.permute.xlu0 0
  %637 = vperm.xlu0 %636, %v515
  %v638 = vpop.permute.xlu0 %637
  %641 = vset.pattern.permute.xlu0 0
  %642 = vperm.xlu0 %641, %v516
  %v643 = vpop.permute.xlu0 %642
  %v645 = vsub.f32 %v389, %v568
  %v646 = vsub.f32 %v390, %v573
  %v647 = vsub.f32 %v391, %v578
  %v648 = vsub.f32 %v392, %v583
  %v649 = vsub.f32 %v393, %v588
  %v650 = vsub.f32 %v394, %v593
  %v651 = vsub.f32 %v395, %v598
  %v652 = vsub.f32 %v396, %v603
  %v653 = vsub.f32 %v397, %v608
  %v654 = vsub.f32 %v398, %v613
  %v655 = vsub.f32 %v399, %v618
  %v656 = vsub.f32 %v400, %v623
  %v657 = vsub.f32 %v401, %v628
  %v658 = vsub.f32 %v402, %v633
  %v659 = vsub.f32 %v403, %v638
  %v660 = vsub.f32 %v404, %v643
  %v661 = vmul.f32 %v645, 1.442695
  %v662 = vpow.pop %v661
  %v663 = vmul.f32 %v646, 1.442695
  %v664 = vpow.pop %v663
  %v665 = vmul.f32 %v647, 1.442695
  %v666 = vpow.pop %v665
  %v667 = vmul.f32 %v648, 1.442695
  %v668 = vpow.pop %v667
  %v669 = vmul.f32 %v649, 1.442695
  %v670 = vpow.pop %v669
  %v671 = vmul.f32 %v650, 1.442695
  %v672 = vpow.pop %v671
  %v673 = vmul.f32 %v651, 1.442695
  %v674 = vpow.pop %v673
  %v675 = vmul.f32 %v652, 1.442695
  %v676 = vpow.pop %v675
  %v677 = vmul.f32 %v653, 1.442695
  %v678 = vpow.pop %v677
  %v679 = vmul.f32 %v654, 1.442695
  %v680 = vpow.pop %v679
  %v681 = vmul.f32 %v655, 1.442695
  %v682 = vpow.pop %v681
  %v683 = vmul.f32 %v656, 1.442695
  %v684 = vpow.pop %v683
  %v685 = vmul.f32 %v657, 1.442695
  %v686 = vpow.pop %v685
  %v687 = vmul.f32 %v658, 1.442695
  %v688 = vpow.pop %v687
  %v689 = vmul.f32 %v659, 1.442695
  %v690 = vpow.pop %v689
  %v691 = vmul.f32 %v660, 1.442695
  %v692 = vpow.pop %v691
  %s693 = smul.u32 0, 128
  %p694 = scmp.ge.s32.totalorder %s381, %s693
  %s695 = sadd.s32 0, 1
  %s696 = smul.u32 %s695, 128
  %p697 = scmp.lt.s32.totalorder %s381, %s696
  %p698 = pnand %p694, %p697
  %p699 = pneg %p698
  // Predicated region
  $region26: #{tpu_custom_call.1} parent=0 // pred_check
    _
  $region27: #{tpu_custom_call.1} parent=0 // pred_check_branch
    %701 = sbr.rel (%p698) target = $region29
  $region28: #{tpu_custom_call.1} parent=0 // pred_region
    %v702 = vlaneseq
    %v703 = vshrl.u32 %v702, 7
    %v704 = vadd.s32 %v703, 8
    %v705 = vadd.s32 %v703, 16
    %v706 = vadd.s32 %v703, 24
    %v707 = vadd.s32 %v703, 32
    %v708 = vadd.s32 %v703, 40
    %v709 = vadd.s32 %v703, 48
    %v710 = vadd.s32 %v703, 56
    %v711 = vadd.s32 %v703, 64
    %v712 = vadd.s32 %v703, 72
    %v713 = vadd.s32 %v703, 80
    %v714 = vadd.s32 %v703, 88
    %v715 = vadd.s32 %v703, 96
    %v716 = vadd.s32 %v703, 104
    %v717 = vadd.s32 %v703, 112
    %v718 = vadd.s32 %v703, 120
    %v719 = vstv %s693
    %v720 = vadd.s32 %v719, %v703
    %v721 = vadd.s32 %v719, %v704
    %v722 = vadd.s32 %v719, %v705
    %v723 = vadd.s32 %v719, %v706
    %v724 = vadd.s32 %v719, %v707
    %v725 = vadd.s32 %v719, %v708
    %v726 = vadd.s32 %v719, %v709
    %v727 = vadd.s32 %v719, %v710
    %v728 = vadd.s32 %v719, %v711
    %v729 = vadd.s32 %v719, %v712
    %v730 = vadd.s32 %v719, %v713
    %v731 = vadd.s32 %v719, %v714
    %v732 = vadd.s32 %v719, %v715
    %v733 = vadd.s32 %v719, %v716
    %v734 = vadd.s32 %v719, %v717
    %v735 = vadd.s32 %v719, %v718
    %vm736 = vcmp.ne.s32.totalorder %v720, %v385
    %vm737 = vcmp.ne.s32.totalorder %v721, %v385
    %vm738 = vcmp.ne.s32.totalorder %v722, %v385
    %vm739 = vcmp.ne.s32.totalorder %v723, %v385
    %vm740 = vcmp.ne.s32.totalorder %v724, %v385
    %vm741 = vcmp.ne.s32.totalorder %v725, %v385
    %vm742 = vcmp.ne.s32.totalorder %v726, %v385
    %vm743 = vcmp.ne.s32.totalorder %v727, %v385
    %vm744 = vcmp.ne.s32.totalorder %v728, %v385
    %vm745 = vcmp.ne.s32.totalorder %v729, %v385
    %vm746 = vcmp.ne.s32.totalorder %v730, %v385
    %vm747 = vcmp.ne.s32.totalorder %v731, %v385
    %vm748 = vcmp.ne.s32.totalorder %v732, %v385
    %vm749 = vcmp.ne.s32.totalorder %v733, %v385
    %vm750 = vcmp.ne.s32.totalorder %v734, %v385
    %vm751 = vcmp.ne.s32.totalorder %v735, %v385
    %v752 = vsel %vm736, 1, 0
    %v753 = vsel %vm737, 1, 0
    %v754 = vsel %vm738, 1, 0
    %v755 = vsel %vm739, 1, 0
    %v756 = vsel %vm740, 1, 0
    %v757 = vsel %vm741, 1, 0
    %v758 = vsel %vm742, 1, 0
    %v759 = vsel %vm743, 1, 0
    %v760 = vsel %vm744, 1, 0
    %v761 = vsel %vm745, 1, 0
    %v762 = vsel %vm746, 1, 0
    %v763 = vsel %vm747, 1, 0
    %v764 = vsel %vm748, 1, 0
    %v765 = vsel %vm749, 1, 0
    %v766 = vsel %vm750, 1, 0
    %v767 = vsel %vm751, 1, 0
    %v768 = vcvt.s32.f32 %v752
    %v769 = vcvt.s32.f32 %v753
    %v770 = vcvt.s32.f32 %v754
    %v771 = vcvt.s32.f32 %v755
    %v772 = vcvt.s32.f32 %v756
    %v773 = vcvt.s32.f32 %v757
    %v774 = vcvt.s32.f32 %v758
    %v775 = vcvt.s32.f32 %v759
    %v776 = vcvt.s32.f32 %v760
    %v777 = vcvt.s32.f32 %v761
    %v778 = vcvt.s32.f32 %v762
    %v779 = vcvt.s32.f32 %v763
    %v780 = vcvt.s32.f32 %v764
    %v781 = vcvt.s32.f32 %v765
    %v782 = vcvt.s32.f32 %v766
    %v783 = vcvt.s32.f32 %v767
    %v784 = vmul.f32 %v662, %v768
    %v785 = vmul.f32 %v664, %v769
    %v786 = vmul.f32 %v666, %v770
    %v787 = vmul.f32 %v668, %v771
    %v788 = vmul.f32 %v670, %v772
    %v789 = vmul.f32 %v672, %v773
    %v790 = vmul.f32 %v674, %v774
    %v791 = vmul.f32 %v676, %v775
    %v792 = vmul.f32 %v678, %v776
    %v793 = vmul.f32 %v680, %v777
    %v794 = vmul.f32 %v682, %v778
    %v795 = vmul.f32 %v684, %v779
    %v796 = vmul.f32 %v686, %v780
    %v797 = vmul.f32 %v688, %v781
    %v798 = vmul.f32 %v690, %v782
    %v799 = vmul.f32 %v692, %v783
    %v800 = vmul.f32 %v437, %v768
    %v801 = vmul.f32 %v438, %v769
    %v802 = vmul.f32 %v439, %v770
    %v803 = vmul.f32 %v440, %v771
    %v804 = vmul.f32 %v441, %v772
    %v805 = vmul.f32 %v442, %v773
    %v806 = vmul.f32 %v443, %v774
    %v807 = vmul.f32 %v444, %v775
    %v808 = vmul.f32 %v445, %v776
    %v809 = vmul.f32 %v446, %v777
    %v810 = vmul.f32 %v447, %v778
    %v811 = vmul.f32 %v448, %v779
    %v812 = vmul.f32 %v449, %v780
    %v813 = vmul.f32 %v450, %v781
    %v814 = vmul.f32 %v451, %v782
    %v815 = vmul.f32 %v452, %v783
    %v816 = vld [vmem:[#allocation3] sm:$0xff]
    %v817 = vld [vmem:[#allocation3 + $0x8] sm:$0xff]
    %v818 = vld [vmem:[#allocation3 + $0x10] sm:$0xff]
    %v819 = vld [vmem:[#allocation3 + $0x18] sm:$0xff]
    %v820 = vld [vmem:[#allocation3 + $0x20] sm:$0xff]
    %v821 = vld [vmem:[#allocation3 + $0x28] sm:$0xff]
    %v822 = vld [vmem:[#allocation3 + $0x30] sm:$0xff]
    %v823 = vld [vmem:[#allocation3 + $0x38] sm:$0xff]
    %v824 = vld [vmem:[#allocation3 + $0x40] sm:$0xff]
    %v825 = vld [vmem:[#allocation3 + $0x48] sm:$0xff]
    %v826 = vld [vmem:[#allocation3 + $0x50] sm:$0xff]
    %v827 = vld [vmem:[#allocation3 + $0x58] sm:$0xff]
    %v828 = vld [vmem:[#allocation3 + $0x60] sm:$0xff]
    %v829 = vld [vmem:[#allocation3 + $0x68] sm:$0xff]
    %v830 = vld [vmem:[#allocation3 + $0x70] sm:$0xff]
    %v831 = vld [vmem:[#allocation3 + $0x78] sm:$0xff]
    %v832 = vmul.f32 %v534, %v816
    %v833 = vmul.f32 %v536, %v817
    %v834 = vmul.f32 %v538, %v818
    %v835 = vmul.f32 %v540, %v819
    %v836 = vmul.f32 %v542, %v820
    %v837 = vmul.f32 %v544, %v821
    %v838 = vmul.f32 %v546, %v822
    %v839 = vmul.f32 %v548, %v823
    %v840 = vmul.f32 %v550, %v824
    %v841 = vmul.f32 %v552, %v825
    %v842 = vmul.f32 %v554, %v826
    %v843 = vmul.f32 %v556, %v827
    %v844 = vmul.f32 %v558, %v828
    %v845 = vmul.f32 %v560, %v829
    %v846 = vmul.f32 %v562, %v830
    %v847 = vmul.f32 %v564, %v831
    %848 = vadd.xlane.f32.xlu0 %v784
    %v849 = vpop.xlane.xlu0 %848
    %850 = vadd.xlane.f32.xlu0 %v785
    %v851 = vpop.xlane.xlu0 %850
    %852 = vadd.xlane.f32.xlu0 %v786
    %v853 = vpop.xlane.xlu0 %852
    %854 = vadd.xlane.f32.xlu0 %v787
    %v855 = vpop.xlane.xlu0 %854
    %856 = vadd.xlane.f32.xlu0 %v788
    %v857 = vpop.xlane.xlu0 %856
    %858 = vadd.xlane.f32.xlu0 %v789
    %v859 = vpop.xlane.xlu0 %858
    %860 = vadd.xlane.f32.xlu0 %v790
    %v861 = vpop.xlane.xlu0 %860
    %862 = vadd.xlane.f32.xlu0 %v791
    %v863 = vpop.xlane.xlu0 %862
    %864 = vadd.xlane.f32.xlu0 %v792
    %v865 = vpop.xlane.xlu0 %864
    %866 = vadd.xlane.f32.xlu0 %v793
    %v867 = vpop.xlane.xlu0 %866
    %868 = vadd.xlane.f32.xlu0 %v794
    %v869 = vpop.xlane.xlu0 %868
    %870 = vadd.xlane.f32.xlu0 %v795
    %v871 = vpop.xlane.xlu0 %870
    %872 = vadd.xlane.f32.xlu0 %v796
    %v873 = vpop.xlane.xlu0 %872
    %874 = vadd.xlane.f32.xlu0 %v797
    %v875 = vpop.xlane.xlu0 %874
    %876 = vadd.xlane.f32.xlu0 %v798
    %v877 = vpop.xlane.xlu0 %876
    %878 = vadd.xlane.f32.xlu0 %v799
    %v879 = vpop.xlane.xlu0 %878
    %v880 = vadd.f32 %v832, %v849
    %v881 = vadd.f32 %v833, %v851
    %v882 = vadd.f32 %v834, %v853
    %v883 = vadd.f32 %v835, %v855
    %v884 = vadd.f32 %v836, %v857
    %v885 = vadd.f32 %v837, %v859
    %v886 = vadd.f32 %v838, %v861
    %v887 = vadd.f32 %v839, %v863
    %v888 = vadd.f32 %v840, %v865
    %v889 = vadd.f32 %v841, %v867
    %v890 = vadd.f32 %v842, %v869
    %v891 = vadd.f32 %v843, %v871
    %v892 = vadd.f32 %v844, %v873
    %v893 = vadd.f32 %v845, %v875
    %v894 = vadd.f32 %v846, %v877
    %v895 = vadd.f32 %v847, %v879
    %vm896 = vcmask 7168
    %897 = vst.msk [vmem:[#allocation3] sm:$0xff] %vm896, %v880
    %898 = vst.msk [vmem:[#allocation3 + $0x8] sm:$0xff] %vm896, %v881
    %899 = vst.msk [vmem:[#allocation3 + $0x10] sm:$0xff] %vm896, %v882
    %900 = vst.msk [vmem:[#allocation3 + $0x18] sm:$0xff] %vm896, %v883
    %901 = vst.msk [vmem:[#allocation3 + $0x20] sm:$0xff] %vm896, %v884
    %902 = vst.msk [vmem:[#allocation3 + $0x28] sm:$0xff] %vm896, %v885
    %903 = vst.msk [vmem:[#allocation3 + $0x30] sm:$0xff] %vm896, %v886
    %904 = vst.msk [vmem:[#allocation3 + $0x38] sm:$0xff] %vm896, %v887
    %905 = vst.msk [vmem:[#allocation3 + $0x40] sm:$0xff] %vm896, %v888
    %906 = vst.msk [vmem:[#allocation3 + $0x48] sm:$0xff] %vm896, %v889
    %907 = vst.msk [vmem:[#allocation3 + $0x50] sm:$0xff] %vm896, %v890
    %908 = vst.msk [vmem:[#allocation3 + $0x58] sm:$0xff] %vm896, %v891
    %909 = vst.msk [vmem:[#allocation3 + $0x60] sm:$0xff] %vm896, %v892
    %910 = vst.msk [vmem:[#allocation3 + $0x68] sm:$0xff] %vm896, %v893
    %911 = vst.msk [vmem:[#allocation3 + $0x70] sm:$0xff] %vm896, %v894
    %912 = vst.msk [vmem:[#allocation3 + $0x78] sm:$0xff] %vm896, %v895
    %v913 = vld [vmem:[#allocation4] sm:$0xff]
    %v914 = vld [vmem:[#allocation4 + $0x8] sm:$0xff]
    %v915 = vld [vmem:[#allocation4 + $0x10] sm:$0xff]
    %v916 = vld [vmem:[#allocation4 + $0x18] sm:$0xff]
    %v917 = vld [vmem:[#allocation4 + $0x20] sm:$0xff]
    %v918 = vld [vmem:[#allocation4 + $0x28] sm:$0xff]
    %v919 = vld [vmem:[#allocation4 + $0x30] sm:$0xff]
    %v920 = vld [vmem:[#allocation4 + $0x38] sm:$0xff]
    %v921 = vld [vmem:[#allocation4 + $0x40] sm:$0xff]
    %v922 = vld [vmem:[#allocation4 + $0x48] sm:$0xff]
    %v923 = vld [vmem:[#allocation4 + $0x50] sm:$0xff]
    %v924 = vld [vmem:[#allocation4 + $0x58] sm:$0xff]
    %v925 = vld [vmem:[#allocation4 + $0x60] sm:$0xff]
    %v926 = vld [vmem:[#allocation4 + $0x68] sm:$0xff]
    %v927 = vld [vmem:[#allocation4 + $0x70] sm:$0xff]
    %v928 = vld [vmem:[#allocation4 + $0x78] sm:$0xff]
    %v929 = vmul.f32 %v800, %v283
    %v930 = vmul.f32 %v801, %v284
    %v931 = vmul.f32 %v802, %v285
    %v932 = vmul.f32 %v803, %v286
    %v933 = vmul.f32 %v804, %v287
    %v934 = vmul.f32 %v805, %v288
    %v935 = vmul.f32 %v806, %v289
    %v936 = vmul.f32 %v807, %v290
    %v937 = vmul.f32 %v808, %v291
    %v938 = vmul.f32 %v809, %v292
    %v939 = vmul.f32 %v810, %v293
    %v940 = vmul.f32 %v811, %v294
    %v941 = vmul.f32 %v812, %v295
    %v942 = vmul.f32 %v813, %v296
    %v943 = vmul.f32 %v814, %v297
    %v944 = vmul.f32 %v815, %v298
    %945 = vadd.xlane.f32.xlu0 %v929
    %v946 = vpop.xlane.xlu0 %945
    %947 = vadd.xlane.f32.xlu0 %v930
    %v948 = vpop.xlane.xlu0 %947
    %949 = vadd.xlane.f32.xlu0 %v931
    %v950 = vpop.xlane.xlu0 %949
    %951 = vadd.xlane.f32.xlu0 %v932
    %v952 = vpop.xlane.xlu0 %951
    %953 = vadd.xlane.f32.xlu0 %v933
    %v954 = vpop.xlane.xlu0 %953
    %955 = vadd.xlane.f32.xlu0 %v934
    %v956 = vpop.xlane.xlu0 %955
    %957 = vadd.xlane.f32.xlu0 %v935
    %v958 = vpop.xlane.xlu0 %957
    %959 = vadd.xlane.f32.xlu0 %v936
    %v960 = vpop.xlane.xlu0 %959
    %961 = vadd.xlane.f32.xlu0 %v937
    %v962 = vpop.xlane.xlu0 %961
    %963 = vadd.xlane.f32.xlu0 %v938
    %v964 = vpop.xlane.xlu0 %963
    %965 = vadd.xlane.f32.xlu0 %v939
    %v966 = vpop.xlane.xlu0 %965
    %967 = vadd.xlane.f32.xlu0 %v940
    %v968 = vpop.xlane.xlu0 %967
    %969 = vadd.xlane.f32.xlu0 %v941
    %v970 = vpop.xlane.xlu0 %969
    %971 = vadd.xlane.f32.xlu0 %v942
    %v972 = vpop.xlane.xlu0 %971
    %973 = vadd.xlane.f32.xlu0 %v943
    %v974 = vpop.xlane.xlu0 %973
    %975 = vadd.xlane.f32.xlu0 %v944
    %v976 = vpop.xlane.xlu0 %975
    %v977 = vadd.f32 %v913, %v946
    %v978 = vadd.f32 %v914, %v948
    %v979 = vadd.f32 %v915, %v950
    %v980 = vadd.f32 %v916, %v952
    %v981 = vadd.f32 %v917, %v954
    %v982 = vadd.f32 %v918, %v956
    %v983 = vadd.f32 %v919, %v958
    %v984 = vadd.f32 %v920, %v960
    %v985 = vadd.f32 %v921, %v962
    %v986 = vadd.f32 %v922, %v964
    %v987 = vadd.f32 %v923, %v966
    %v988 = vadd.f32 %v924, %v968
    %v989 = vadd.f32 %v925, %v970
    %v990 = vadd.f32 %v926, %v972
    %v991 = vadd.f32 %v927, %v974
    %v992 = vadd.f32 %v928, %v976
    %993 = vst.msk [vmem:[#allocation4] sm:$0xff] %vm896, %v977
    %994 = vst.msk [vmem:[#allocation4 + $0x8] sm:$0xff] %vm896, %v978
    %995 = vst.msk [vmem:[#allocation4 + $0x10] sm:$0xff] %vm896, %v979
    %996 = vst.msk [vmem:[#allocation4 + $0x18] sm:$0xff] %vm896, %v980
    %997 = vst.msk [vmem:[#allocation4 + $0x20] sm:$0xff] %vm896, %v981
    %998 = vst.msk [vmem:[#allocation4 + $0x28] sm:$0xff] %vm896, %v982
    %999 = vst.msk [vmem:[#allocation4 + $0x30] sm:$0xff] %vm896, %v983
    %1000 = vst.msk [vmem:[#allocation4 + $0x38] sm:$0xff] %vm896, %v984
    %1001 = vst.msk [vmem:[#allocation4 + $0x40] sm:$0xff] %vm896, %v985
    %1002 = vst.msk [vmem:[#allocation4 + $0x48] sm:$0xff] %vm896, %v986
    %1003 = vst.msk [vmem:[#allocation4 + $0x50] sm:$0xff] %vm896, %v987
    %1004 = vst.msk [vmem:[#allocation4 + $0x58] sm:$0xff] %vm896, %v988
    %1005 = vst.msk [vmem:[#allocation4 + $0x60] sm:$0xff] %vm896, %v989
    %1006 = vst.msk [vmem:[#allocation4 + $0x68] sm:$0xff] %vm896, %v990
    %1007 = vst.msk [vmem:[#allocation4 + $0x70] sm:$0xff] %vm896, %v991
    %1008 = vst.msk [vmem:[#allocation4 + $0x78] sm:$0xff] %vm896, %v992
  $region29: #{tpu_custom_call.1} parent=0 // pred_fallthru
    _
  %p1009 = pneg %p699
  // Predicated region
  $region30: #{tpu_custom_call.1} parent=0 // pred_check
    _
  $region31: #{tpu_custom_call.1} parent=0 // pred_check_branch
    %1011 = sbr.rel (%p699) target = $region33
  $region32: #{tpu_custom_call.1} parent=0 // pred_region
    %v1012 = vld [vmem:[#allocation3] sm:$0xff]
    %v1013 = vld [vmem:[#allocation3 + $0x8] sm:$0xff]
    %v1014 = vld [vmem:[#allocation3 + $0x10] sm:$0xff]
    %v1015 = vld [vmem:[#allocation3 + $0x18] sm:$0xff]
    %v1016 = vld [vmem:[#allocation3 + $0x20] sm:$0xff]
    %v1017 = vld [vmem:[#allocation3 + $0x28] sm:$0xff]
    %v1018 = vld [vmem:[#allocation3 + $0x30] sm:$0xff]
    %v1019 = vld [vmem:[#allocation3 + $0x38] sm:$0xff]
    %v1020 = vld [vmem:[#allocation3 + $0x40] sm:$0xff]
    %v1021 = vld [vmem:[#allocation3 + $0x48] sm:$0xff]
    %v1022 = vld [vmem:[#allocation3 + $0x50] sm:$0xff]
    %v1023 = vld [vmem:[#allocation3 + $0x58] sm:$0xff]
    %v1024 = vld [vmem:[#allocation3 + $0x60] sm:$0xff]
    %v1025 = vld [vmem:[#allocation3 + $0x68] sm:$0xff]
    %v1026 = vld [vmem:[#allocation3 + $0x70] sm:$0xff]
    %v1027 = vld [vmem:[#allocation3 + $0x78] sm:$0xff]
    %v1028 = vmul.f32 %v534, %v1012
    %v1029 = vmul.f32 %v536, %v1013
    %v1030 = vmul.f32 %v538, %v1014
    %v1031 = vmul.f32 %v540, %v1015
    %v1032 = vmul.f32 %v542, %v1016
    %v1033 = vmul.f32 %v544, %v1017
    %v1034 = vmul.f32 %v546, %v1018
    %v1035 = vmul.f32 %v548, %v1019
    %v1036 = vmul.f32 %v550, %v1020
    %v1037 = vmul.f32 %v552, %v1021
    %v1038 = vmul.f32 %v554, %v1022
    %v1039 = vmul.f32 %v556, %v1023
    %v1040 = vmul.f32 %v558, %v1024
    %v1041 = vmul.f32 %v560, %v1025
    %v1042 = vmul.f32 %v562, %v1026
    %v1043 = vmul.f32 %v564, %v1027
    %1044 = vadd.xlane.f32.xlu0 %v662
    %v1045 = vpop.xlane.xlu0 %1044
    %1046 = vadd.xlane.f32.xlu0 %v664
    %v1047 = vpop.xlane.xlu0 %1046
    %1048 = vadd.xlane.f32.xlu0 %v666
    %v1049 = vpop.xlane.xlu0 %1048
    %1050 = vadd.xlane.f32.xlu0 %v668
    %v1051 = vpop.xlane.xlu0 %1050
    %1052 = vadd.xlane.f32.xlu0 %v670
    %v1053 = vpop.xlane.xlu0 %1052
    %1054 = vadd.xlane.f32.xlu0 %v672
    %v1055 = vpop.xlane.xlu0 %1054
    %1056 = vadd.xlane.f32.xlu0 %v674
    %v1057 = vpop.xlane.xlu0 %1056
    %1058 = vadd.xlane.f32.xlu0 %v676
    %v1059 = vpop.xlane.xlu0 %1058
    %1060 = vadd.xlane.f32.xlu0 %v678
    %v1061 = vpop.xlane.xlu0 %1060
    %1062 = vadd.xlane.f32.xlu0 %v680
    %v1063 = vpop.xlane.xlu0 %1062
    %1064 = vadd.xlane.f32.xlu0 %v682
    %v1065 = vpop.xlane.xlu0 %1064
    %1066 = vadd.xlane.f32.xlu0 %v684
    %v1067 = vpop.xlane.xlu0 %1066
    %1068 = vadd.xlane.f32.xlu0 %v686
    %v1069 = vpop.xlane.xlu0 %1068
    %1070 = vadd.xlane.f32.xlu0 %v688
    %v1071 = vpop.xlane.xlu0 %1070
    %1072 = vadd.xlane.f32.xlu0 %v690
    %v1073 = vpop.xlane.xlu0 %1072
    %1074 = vadd.xlane.f32.xlu0 %v692
    %v1075 = vpop.xlane.xlu0 %1074
    %v1076 = vadd.f32 %v1028, %v1045
    %v1077 = vadd.f32 %v1029, %v1047
    %v1078 = vadd.f32 %v1030, %v1049
    %v1079 = vadd.f32 %v1031, %v1051
    %v1080 = vadd.f32 %v1032, %v1053
    %v1081 = vadd.f32 %v1033, %v1055
    %v1082 = vadd.f32 %v1034, %v1057
    %v1083 = vadd.f32 %v1035, %v1059
    %v1084 = vadd.f32 %v1036, %v1061
    %v1085 = vadd.f32 %v1037, %v1063
    %v1086 = vadd.f32 %v1038, %v1065
    %v1087 = vadd.f32 %v1039, %v1067
    %v1088 = vadd.f32 %v1040, %v1069
    %v1089 = vadd.f32 %v1041, %v1071
    %v1090 = vadd.f32 %v1042, %v1073
    %v1091 = vadd.f32 %v1043, %v1075
    %vm1092 = vcmask 7168
    %1093 = vst.msk [vmem:[#allocation3] sm:$0xff] %vm1092, %v1076
    %1094 = vst.msk [vmem:[#allocation3 + $0x8] sm:$0xff] %vm1092, %v1077
    %1095 = vst.msk [vmem:[#allocation3 + $0x10] sm:$0xff] %vm1092, %v1078
    %1096 = vst.msk [vmem:[#allocation3 + $0x18] sm:$0xff] %vm1092, %v1079
    %1097 = vst.msk [vmem:[#allocation3 + $0x20] sm:$0xff] %vm1092, %v1080
    %1098 = vst.msk [vmem:[#allocation3 + $0x28] sm:$0xff] %vm1092, %v1081
    %1099 = vst.msk [vmem:[#allocation3 + $0x30] sm:$0xff] %vm1092, %v1082
    %1100 = vst.msk [vmem:[#allocation3 + $0x38] sm:$0xff] %vm1092, %v1083
    %1101 = vst.msk [vmem:[#allocation3 + $0x40] sm:$0xff] %vm1092, %v1084
    %1102 = vst.msk [vmem:[#allocation3 + $0x48] sm:$0xff] %vm1092, %v1085
    %1103 = vst.msk [vmem:[#allocation3 + $0x50] sm:$0xff] %vm1092, %v1086
    %1104 = vst.msk [vmem:[#allocation3 + $0x58] sm:$0xff] %vm1092, %v1087
    %1105 = vst.msk [vmem:[#allocation3 + $0x60] sm:$0xff] %vm1092, %v1088
    %1106 = vst.msk [vmem:[#allocation3 + $0x68] sm:$0xff] %vm1092, %v1089
    %1107 = vst.msk [vmem:[#allocation3 + $0x70] sm:$0xff] %vm1092, %v1090
    %1108 = vst.msk [vmem:[#allocation3 + $0x78] sm:$0xff] %vm1092, %v1091
    %v1109 = vld [vmem:[#allocation4] sm:$0xff]
    %v1110 = vld [vmem:[#allocation4 + $0x8] sm:$0xff]
    %v1111 = vld [vmem:[#allocation4 + $0x10] sm:$0xff]
    %v1112 = vld [vmem:[#allocation4 + $0x18] sm:$0xff]
    %v1113 = vld [vmem:[#allocation4 + $0x20] sm:$0xff]
    %v1114 = vld [vmem:[#allocation4 + $0x28] sm:$0xff]
    %v1115 = vld [vmem:[#allocation4 + $0x30] sm:$0xff]
    %v1116 = vld [vmem:[#allocation4 + $0x38] sm:$0xff]
    %v1117 = vld [vmem:[#allocation4 + $0x40] sm:$0xff]
    %v1118 = vld [vmem:[#allocation4 + $0x48] sm:$0xff]
    %v1119 = vld [vmem:[#allocation4 + $0x50] sm:$0xff]
    %v1120 = vld [vmem:[#allocation4 + $0x58] sm:$0xff]
    %v1121 = vld [vmem:[#allocation4 + $0x60] sm:$0xff]
    %v1122 = vld [vmem:[#allocation4 + $0x68] sm:$0xff]
    %v1123 = vld [vmem:[#allocation4 + $0x70] sm:$0xff]
    %v1124 = vld [vmem:[#allocation4 + $0x78] sm:$0xff]
    %v1125 = vmul.f32 %v437, %v283
    %v1126 = vmul.f32 %v438, %v284
    %v1127 = vmul.f32 %v439, %v285
    %v1128 = vmul.f32 %v440, %v286
    %v1129 = vmul.f32 %v441, %v287
    %v1130 = vmul.f32 %v442, %v288
    %v1131 = vmul.f32 %v443, %v289
    %v1132 = vmul.f32 %v444, %v290
    %v1133 = vmul.f32 %v445, %v291
    %v1134 = vmul.f32 %v446, %v292
    %v1135 = vmul.f32 %v447, %v293
    %v1136 = vmul.f32 %v448, %v294
    %v1137 = vmul.f32 %v449, %v295
    %v1138 = vmul.f32 %v450, %v296
    %v1139 = vmul.f32 %v451, %v297
    %v1140 = vmul.f32 %v452, %v298
    %1141 = vadd.xlane.f32.xlu0 %v1125
    %v1142 = vpop.xlane.xlu0 %1141
    %1143 = vadd.xlane.f32.xlu0 %v1126
    %v1144 = vpop.xlane.xlu0 %1143
    %1145 = vadd.xlane.f32.xlu0 %v1127
    %v1146 = vpop.xlane.xlu0 %1145
    %1147 = vadd.xlane.f32.xlu0 %v1128
    %v1148 = vpop.xlane.xlu0 %1147
    %1149 = vadd.xlane.f32.xlu0 %v1129
    %v1150 = vpop.xlane.xlu0 %1149
    %1151 = vadd.xlane.f32.xlu0 %v1130
    %v1152 = vpop.xlane.xlu0 %1151
    %1153 = vadd.xlane.f32.xlu0 %v1131
    %v1154 = vpop.xlane.xlu0 %1153
    %1155 = vadd.xlane.f32.xlu0 %v1132
    %v1156 = vpop.xlane.xlu0 %1155
    %1157 = vadd.xlane.f32.xlu0 %v1133
    %v1158 = vpop.xlane.xlu0 %1157
    %1159 = vadd.xlane.f32.xlu0 %v1134
    %v1160 = vpop.xlane.xlu0 %1159
    %1161 = vadd.xlane.f32.xlu0 %v1135
    %v1162 = vpop.xlane.xlu0 %1161
    %1163 = vadd.xlane.f32.xlu0 %v1136
    %v1164 = vpop.xlane.xlu0 %1163
    %1165 = vadd.xlane.f32.xlu0 %v1137
    %v1166 = vpop.xlane.xlu0 %1165
    %1167 = vadd.xlane.f32.xlu0 %v1138
    %v1168 = vpop.xlane.xlu0 %1167
    %1169 = vadd.xlane.f32.xlu0 %v1139
    %v1170 = vpop.xlane.xlu0 %1169
    %1171 = vadd.xlane.f32.xlu0 %v1140
    %v1172 = vpop.xlane.xlu0 %1171
    %v1173 = vadd.f32 %v1109, %v1142
    %v1174 = vadd.f32 %v1110, %v1144
    %v1175 = vadd.f32 %v1111, %v1146
    %v1176 = vadd.f32 %v1112, %v1148
    %v1177 = vadd.f32 %v1113, %v1150
    %v1178 = vadd.f32 %v1114, %v1152
    %v1179 = vadd.f32 %v1115, %v1154
    %v1180 = vadd.f32 %v1116, %v1156
    %v1181 = vadd.f32 %v1117, %v1158
    %v1182 = vadd.f32 %v1118, %v1160
    %v1183 = vadd.f32 %v1119, %v1162
    %v1184 = vadd.f32 %v1120, %v1164
    %v1185 = vadd.f32 %v1121, %v1166
    %v1186 = vadd.f32 %v1122, %v1168
    %v1187 = vadd.f32 %v1123, %v1170
    %v1188 = vadd.f32 %v1124, %v1172
    %1189 = vst.msk [vmem:[#allocation4] sm:$0xff] %vm1092, %v1173
    %1190 = vst.msk [vmem:[#allocation4 + $0x8] sm:$0xff] %vm1092, %v1174
    %1191 = vst.msk [vmem:[#allocation4 + $0x10] sm:$0xff] %vm1092, %v1175
    %1192 = vst.msk [vmem:[#allocation4 + $0x18] sm:$0xff] %vm1092, %v1176
    %1193 = vst.msk [vmem:[#allocation4 + $0x20] sm:$0xff] %vm1092, %v1177
    %1194 = vst.msk [vmem:[#allocation4 + $0x28] sm:$0xff] %vm1092, %v1178
    %1195 = vst.msk [vmem:[#allocation4 + $0x30] sm:$0xff] %vm1092, %v1179
    %1196 = vst.msk [vmem:[#allocation4 + $0x38] sm:$0xff] %vm1092, %v1180
    %1197 = vst.msk [vmem:[#allocation4 + $0x40] sm:$0xff] %vm1092, %v1181
    %1198 = vst.msk [vmem:[#allocation4 + $0x48] sm:$0xff] %vm1092, %v1182
    %1199 = vst.msk [vmem:[#allocation4 + $0x50] sm:$0xff] %vm1092, %v1183
    %1200 = vst.msk [vmem:[#allocation4 + $0x58] sm:$0xff] %vm1092, %v1184
    %1201 = vst.msk [vmem:[#allocation4 + $0x60] sm:$0xff] %vm1092, %v1185
    %1202 = vst.msk [vmem:[#allocation4 + $0x68] sm:$0xff] %vm1092, %v1186
    %1203 = vst.msk [vmem:[#allocation4 + $0x70] sm:$0xff] %vm1092, %v1187
    %1204 = vst.msk [vmem:[#allocation4 + $0x78] sm:$0xff] %vm1092, %v1188
  $region33: #{tpu_custom_call.1} parent=0 // pred_fallthru
    _
  %vm1205 = vcmask 7168
  %1206 = vst.msk [vmem:[#allocation2] sm:$0xff] %vm1205, %v501
  %1207 = vst.msk [vmem:[#allocation2 + $0x8] sm:$0xff] %vm1205, %v502
  %1208 = vst.msk [vmem:[#allocation2 + $0x10] sm:$0xff] %vm1205, %v503
  %1209 = vst.msk [vmem:[#allocation2 + $0x18] sm:$0xff] %vm1205, %v504
  %1210 = vst.msk [vmem:[#allocation2 + $0x20] sm:$0xff] %vm1205, %v505
  %1211 = vst.msk [vmem:[#allocation2 + $0x28] sm:$0xff] %vm1205, %v506
  %1212 = vst.msk [vmem:[#allocation2 + $0x30] sm:$0xff] %vm1205, %v507
  %1213 = vst.msk [vmem:[#allocation2 + $0x38] sm:$0xff] %vm1205, %v508
  %1214 = vst.msk [vmem:[#allocation2 + $0x40] sm:$0xff] %vm1205, %v509
  %1215 = vst.msk [vmem:[#allocation2 + $0x48] sm:$0xff] %vm1205, %v510
  %1216 = vst.msk [vmem:[#allocation2 + $0x50] sm:$0xff] %vm1205, %v511
  %1217 = vst.msk [vmem:[#allocation2 + $0x58] sm:$0xff] %vm1205, %v512
  %1218 = vst.msk [vmem:[#allocation2 + $0x60] sm:$0xff] %vm1205, %v513
  %1219 = vst.msk [vmem:[#allocation2 + $0x68] sm:$0xff] %vm1205, %v514
  %1220 = vst.msk [vmem:[#allocation2 + $0x70] sm:$0xff] %vm1205, %v515
  %1221 = vst.msk [vmem:[#allocation2 + $0x78] sm:$0xff] %vm1205, %v516
  // Predicated region
  $region34: #{tpu_custom_call.1} parent=0 // pred_check
    %p1222 = pneg %p20
  $region35: #{tpu_custom_call.1} parent=0 // pred_check_branch
    %1224 = sbr.rel (%p1222) target = $region37
  $region36: #{tpu_custom_call.1} parent=0 // pred_region
    %v1225 = vld [vmem:[%s4] sm:$0xff]
    %v1226 = vld [vmem:[%s4 + $0x8] sm:$0xff]
    %v1227 = vld [vmem:[%s4 + $0x10] sm:$0xff]
    %v1228 = vld [vmem:[%s4 + $0x18] sm:$0xff]
    %v1229 = vld [vmem:[%s4 + $0x20] sm:$0xff]
    %v1230 = vld [vmem:[%s4 + $0x28] sm:$0xff]
    %v1231 = vld [vmem:[%s4 + $0x30] sm:$0xff]
    %v1232 = vld [vmem:[%s4 + $0x38] sm:$0xff]
    %v1233 = vld [vmem:[%s4 + $0x40] sm:$0xff]
    %v1234 = vld [vmem:[%s4 + $0x48] sm:$0xff]
    %v1235 = vld [vmem:[%s4 + $0x50] sm:$0xff]
    %v1236 = vld [vmem:[%s4 + $0x58] sm:$0xff]
    %v1237 = vld [vmem:[%s4 + $0x60] sm:$0xff]
    %v1238 = vld [vmem:[%s4 + $0x68] sm:$0xff]
    %v1239 = vld [vmem:[%s4 + $0x70] sm:$0xff]
    %v1240 = vld [vmem:[%s4 + $0x78] sm:$0xff]
    %v1241 = vld [vmem:[#allocation2] sm:$0xff]
    %v1242 = vld [vmem:[#allocation2 + $0x8] sm:$0xff]
    %v1243 = vld [vmem:[#allocation2 + $0x10] sm:$0xff]
    %v1244 = vld [vmem:[#allocation2 + $0x18] sm:$0xff]
    %v1245 = vld [vmem:[#allocation2 + $0x20] sm:$0xff]
    %v1246 = vld [vmem:[#allocation2 + $0x28] sm:$0xff]
    %v1247 = vld [vmem:[#allocation2 + $0x30] sm:$0xff]
    %v1248 = vld [vmem:[#allocation2 + $0x38] sm:$0xff]
    %v1249 = vld [vmem:[#allocation2 + $0x40] sm:$0xff]
    %v1250 = vld [vmem:[#allocation2 + $0x48] sm:$0xff]
    %v1251 = vld [vmem:[#allocation2 + $0x50] sm:$0xff]
    %v1252 = vld [vmem:[#allocation2 + $0x58] sm:$0xff]
    %v1253 = vld [vmem:[#allocation2 + $0x60] sm:$0xff]
    %v1254 = vld [vmem:[#allocation2 + $0x68] sm:$0xff]
    %v1255 = vld [vmem:[#allocation2 + $0x70] sm:$0xff]
    %v1256 = vld [vmem:[#allocation2 + $0x78] sm:$0xff]
    %v1257 = vld [vmem:[#allocation3] sm:$0xff]
    %v1258 = vld [vmem:[#allocation3 + $0x8] sm:$0xff]
    %v1259 = vld [vmem:[#allocation3 + $0x10] sm:$0xff]
    %v1260 = vld [vmem:[#allocation3 + $0x18] sm:$0xff]
    %v1261 = vld [vmem:[#allocation3 + $0x20] sm:$0xff]
    %v1262 = vld [vmem:[#allocation3 + $0x28] sm:$0xff]
    %v1263 = vld [vmem:[#allocation3 + $0x30] sm:$0xff]
    %v1264 = vld [vmem:[#allocation3 + $0x38] sm:$0xff]
    %v1265 = vld [vmem:[#allocation3 + $0x40] sm:$0xff]
    %v1266 = vld [vmem:[#allocation3 + $0x48] sm:$0xff]
    %v1267 = vld [vmem:[#allocation3 + $0x50] sm:$0xff]
    %v1268 = vld [vmem:[#allocation3 + $0x58] sm:$0xff]
    %v1269 = vld [vmem:[#allocation3 + $0x60] sm:$0xff]
    %v1270 = vld [vmem:[#allocation3 + $0x68] sm:$0xff]
    %v1271 = vld [vmem:[#allocation3 + $0x70] sm:$0xff]
    %v1272 = vld [vmem:[#allocation3 + $0x78] sm:$0xff]
    %v1273 = vadd.f32 %v1257, 1e-12
    %v1274 = vadd.f32 %v1258, 1e-12
    %v1275 = vadd.f32 %v1259, 1e-12
    %v1276 = vadd.f32 %v1260, 1e-12
    %v1277 = vadd.f32 %v1261, 1e-12
    %v1278 = vadd.f32 %v1262, 1e-12
    %v1279 = vadd.f32 %v1263, 1e-12
    %v1280 = vadd.f32 %v1264, 1e-12
    %v1281 = vadd.f32 %v1265, 1e-12
    %v1282 = vadd.f32 %v1266, 1e-12
    %v1283 = vadd.f32 %v1267, 1e-12
    %v1284 = vadd.f32 %v1268, 1e-12
    %v1285 = vadd.f32 %v1269, 1e-12
    %v1286 = vadd.f32 %v1270, 1e-12
    %v1287 = vadd.f32 %v1271, 1e-12
    %v1288 = vadd.f32 %v1272, 1e-12
    %v1289 = vlog2.pop %v1273
    %v1290 = vmul.f32 %v1289, 0.6931472
    %v1291 = vlog2.pop %v1274
    %v1292 = vmul.f32 %v1291, 0.6931472
    %v1293 = vlog2.pop %v1275
    %v1294 = vmul.f32 %v1293, 0.6931472
    %v1295 = vlog2.pop %v1276
    %v1296 = vmul.f32 %v1295, 0.6931472
    %v1297 = vlog2.pop %v1277
    %v1298 = vmul.f32 %v1297, 0.6931472
    %v1299 = vlog2.pop %v1278
    %v1300 = vmul.f32 %v1299, 0.6931472
    %v1301 = vlog2.pop %v1279
    %v1302 = vmul.f32 %v1301, 0.6931472
    %v1303 = vlog2.pop %v1280
    %v1304 = vmul.f32 %v1303, 0.6931472
    %v1305 = vlog2.pop %v1281
    %v1306 = vmul.f32 %v1305, 0.6931472
    %v1307 = vlog2.pop %v1282
    %v1308 = vmul.f32 %v1307, 0.6931472
    %v1309 = vlog2.pop %v1283
    %v1310 = vmul.f32 %v1309, 0.6931472
    %v1311 = vlog2.pop %v1284
    %v1312 = vmul.f32 %v1311, 0.6931472
    %v1313 = vlog2.pop %v1285
    %v1314 = vmul.f32 %v1313, 0.6931472
    %v1315 = vlog2.pop %v1286
    %v1316 = vmul.f32 %v1315, 0.6931472
    %v1317 = vlog2.pop %v1287
    %v1318 = vmul.f32 %v1317, 0.6931472
    %v1319 = vlog2.pop %v1288
    %v1320 = vmul.f32 %v1319, 0.6931472
    %v1321 = vadd.f32 %v1241, %v1290
    %v1322 = vadd.f32 %v1242, %v1292
    %v1323 = vadd.f32 %v1243, %v1294
    %v1324 = vadd.f32 %v1244, %v1296
    %v1325 = vadd.f32 %v1245, %v1298
    %v1326 = vadd.f32 %v1246, %v1300
    %v1327 = vadd.f32 %v1247, %v1302
    %v1328 = vadd.f32 %v1248, %v1304
    %v1329 = vadd.f32 %v1249, %v1306
    %v1330 = vadd.f32 %v1250, %v1308
    %v1331 = vadd.f32 %v1251, %v1310
    %v1332 = vadd.f32 %v1252, %v1312
    %v1333 = vadd.f32 %v1253, %v1314
    %v1334 = vadd.f32 %v1254, %v1316
    %v1335 = vadd.f32 %v1255, %v1318
    %v1336 = vadd.f32 %v1256, %v1320
    %v1337 = vld [vmem:[#allocation4] sm:$0xff]
    %v1338 = vld [vmem:[#allocation4 + $0x8] sm:$0xff]
    %v1339 = vld [vmem:[#allocation4 + $0x10] sm:$0xff]
    %v1340 = vld [vmem:[#allocation4 + $0x18] sm:$0xff]
    %v1341 = vld [vmem:[#allocation4 + $0x20] sm:$0xff]
    %v1342 = vld [vmem:[#allocation4 + $0x28] sm:$0xff]
    %v1343 = vld [vmem:[#allocation4 + $0x30] sm:$0xff]
    %v1344 = vld [vmem:[#allocation4 + $0x38] sm:$0xff]
    %v1345 = vld [vmem:[#allocation4 + $0x40] sm:$0xff]
    %v1346 = vld [vmem:[#allocation4 + $0x48] sm:$0xff]
    %v1347 = vld [vmem:[#allocation4 + $0x50] sm:$0xff]
    %v1348 = vld [vmem:[#allocation4 + $0x58] sm:$0xff]
    %v1349 = vld [vmem:[#allocation4 + $0x60] sm:$0xff]
    %v1350 = vld [vmem:[#allocation4 + $0x68] sm:$0xff]
    %v1351 = vld [vmem:[#allocation4 + $0x70] sm:$0xff]
    %v1352 = vld [vmem:[#allocation4 + $0x78] sm:$0xff]
    %v1353 = vmul.f32 %v1225, %v1321
    %v1354 = vmul.f32 %v1226, %v1322
    %v1355 = vmul.f32 %v1227, %v1323
    %v1356 = vmul.f32 %v1228, %v1324
    %v1357 = vmul.f32 %v1229, %v1325
    %v1358 = vmul.f32 %v1230, %v1326
    %v1359 = vmul.f32 %v1231, %v1327
    %v1360 = vmul.f32 %v1232, %v1328
    %v1361 = vmul.f32 %v1233, %v1329
    %v1362 = vmul.f32 %v1234, %v1330
    %v1363 = vmul.f32 %v1235, %v1331
    %v1364 = vmul.f32 %v1236, %v1332
    %v1365 = vmul.f32 %v1237, %v1333
    %v1366 = vmul.f32 %v1238, %v1334
    %v1367 = vmul.f32 %v1239, %v1335
    %v1368 = vmul.f32 %v1240, %v1336
    %v1369 = vsub.f32 %v1337, %v1353
    %v1370 = vsub.f32 %v1338, %v1354
    %v1371 = vsub.f32 %v1339, %v1355
    %v1372 = vsub.f32 %v1340, %v1356
    %v1373 = vsub.f32 %v1341, %v1357
    %v1374 = vsub.f32 %v1342, %v1358
    %v1375 = vsub.f32 %v1343, %v1359
    %v1376 = vsub.f32 %v1344, %v1360
    %v1377 = vsub.f32 %v1345, %v1361
    %v1378 = vsub.f32 %v1346, %v1362
    %v1379 = vsub.f32 %v1347, %v1363
    %v1380 = vsub.f32 %v1348, %v1364
    %v1381 = vsub.f32 %v1349, %v1365
    %v1382 = vsub.f32 %v1350, %v1366
    %v1383 = vsub.f32 %v1351, %v1367
    %v1384 = vsub.f32 %v1352, %v1368
    %v1385 = vadd.f32 %v1225, 1e-12
    %v1386 = vadd.f32 %v1226, 1e-12
    %v1387 = vadd.f32 %v1227, 1e-12
    %v1388 = vadd.f32 %v1228, 1e-12
    %v1389 = vadd.f32 %v1229, 1e-12
    %v1390 = vadd.f32 %v1230, 1e-12
    %v1391 = vadd.f32 %v1231, 1e-12
    %v1392 = vadd.f32 %v1232, 1e-12
    %v1393 = vadd.f32 %v1233, 1e-12
    %v1394 = vadd.f32 %v1234, 1e-12
    %v1395 = vadd.f32 %v1235, 1e-12
    %v1396 = vadd.f32 %v1236, 1e-12
    %v1397 = vadd.f32 %v1237, 1e-12
    %v1398 = vadd.f32 %v1238, 1e-12
    %v1399 = vadd.f32 %v1239, 1e-12
    %v1400 = vadd.f32 %v1240, 1e-12
    %v1401 = vrcp.pop %v1385
    %v1402 = vmul.f32 %v1385, %v1401
    %v1403 = vsub.f32 1.0, %v1402
    %v1404 = vmul.f32 %v1401, %v1403
    %v1405 = vadd.f32 %v1401, %v1404
    %vm1406 = vweird.f32 %v1385
    %vm1407 = vweird.f32 %v1401
    %vm1408 = vmor %vm1406, %vm1407
    %v1409 = vsel %vm1408, %v1401, %v1405
    %v1410 = vand.u32 2147483647, %v1385
    %vm1411 = vcmp.eq.f32.partialorder %v1410, 8.507059e+37
    %v1412 = vand.u32 %v1385, 2147483648
    %v1413 = vor.u32 1.1754944e-38, %v1412
    %v1414 = vsel %vm1411, %v1413, %v1409
    %v1415 = vmul.f32 %v1369, %v1414
    %v1416 = vrcp.pop %v1386
    %v1417 = vmul.f32 %v1386, %v1416
    %v1418 = vsub.f32 1.0, %v1417
    %v1419 = vmul.f32 %v1416, %v1418
    %v1420 = vadd.f32 %v1416, %v1419
    %vm1421 = vweird.f32 %v1386
    %vm1422 = vweird.f32 %v1416
    %vm1423 = vmor %vm1421, %vm1422
    %v1424 = vsel %vm1423, %v1416, %v1420
    %v1425 = vand.u32 2147483647, %v1386
    %vm1426 = vcmp.eq.f32.partialorder %v1425, 8.507059e+37
    %v1427 = vand.u32 %v1386, 2147483648
    %v1428 = vor.u32 1.1754944e-38, %v1427
    %v1429 = vsel %vm1426, %v1428, %v1424
    %v1430 = vmul.f32 %v1370, %v1429
    %v1431 = vrcp.pop %v1387
    %v1432 = vmul.f32 %v1387, %v1431
    %v1433 = vsub.f32 1.0, %v1432
    %v1434 = vmul.f32 %v1431, %v1433
    %v1435 = vadd.f32 %v1431, %v1434
    %vm1436 = vweird.f32 %v1387
    %vm1437 = vweird.f32 %v1431
    %vm1438 = vmor %vm1436, %vm1437
    %v1439 = vsel %vm1438, %v1431, %v1435
    %v1440 = vand.u32 2147483647, %v1387
    %vm1441 = vcmp.eq.f32.partialorder %v1440, 8.507059e+37
    %v1442 = vand.u32 %v1387, 2147483648
    %v1443 = vor.u32 1.1754944e-38, %v1442
    %v1444 = vsel %vm1441, %v1443, %v1439
    %v1445 = vmul.f32 %v1371, %v1444
    %v1446 = vrcp.pop %v1388
    %v1447 = vmul.f32 %v1388, %v1446
    %v1448 = vsub.f32 1.0, %v1447
    %v1449 = vmul.f32 %v1446, %v1448
    %v1450 = vadd.f32 %v1446, %v1449
    %vm1451 = vweird.f32 %v1388
    %vm1452 = vweird.f32 %v1446
    %vm1453 = vmor %vm1451, %vm1452
    %v1454 = vsel %vm1453, %v1446, %v1450
    %v1455 = vand.u32 2147483647, %v1388
    %vm1456 = vcmp.eq.f32.partialorder %v1455, 8.507059e+37
    %v1457 = vand.u32 %v1388, 2147483648
    %v1458 = vor.u32 1.1754944e-38, %v1457
    %v1459 = vsel %vm1456, %v1458, %v1454
    %v1460 = vmul.f32 %v1372, %v1459
    %v1461 = vrcp.pop %v1389
    %v1462 = vmul.f32 %v1389, %v1461
    %v1463 = vsub.f32 1.0, %v1462
    %v1464 = vmul.f32 %v1461, %v1463
    %v1465 = vadd.f32 %v1461, %v1464
    %vm1466 = vweird.f32 %v1389
    %vm1467 = vweird.f32 %v1461
    %vm1468 = vmor %vm1466, %vm1467
    %v1469 = vsel %vm1468, %v1461, %v1465
    %v1470 = vand.u32 2147483647, %v1389
    %vm1471 = vcmp.eq.f32.partialorder %v1470, 8.507059e+37
    %v1472 = vand.u32 %v1389, 2147483648
    %v1473 = vor.u32 1.1754944e-38, %v1472
    %v1474 = vsel %vm1471, %v1473, %v1469
    %v1475 = vmul.f32 %v1373, %v1474
    %v1476 = vrcp.pop %v1390
    %v1477 = vmul.f32 %v1390, %v1476
    %v1478 = vsub.f32 1.0, %v1477
    %v1479 = vmul.f32 %v1476, %v1478
    %v1480 = vadd.f32 %v1476, %v1479
    %vm1481 = vweird.f32 %v1390
    %vm1482 = vweird.f32 %v1476
    %vm1483 = vmor %vm1481, %vm1482
    %v1484 = vsel %vm1483, %v1476, %v1480
    %v1485 = vand.u32 2147483647, %v1390
    %vm1486 = vcmp.eq.f32.partialorder %v1485, 8.507059e+37
    %v1487 = vand.u32 %v1390, 2147483648
    %v1488 = vor.u32 1.1754944e-38, %v1487
    %v1489 = vsel %vm1486, %v1488, %v1484
    %v1490 = vmul.f32 %v1374, %v1489
    %v1491 = vrcp.pop %v1391
    %v1492 = vmul.f32 %v1391, %v1491
    %v1493 = vsub.f32 1.0, %v1492
    %v1494 = vmul.f32 %v1491, %v1493
    %v1495 = vadd.f32 %v1491, %v1494
    %vm1496 = vweird.f32 %v1391
    %vm1497 = vweird.f32 %v1491
    %vm1498 = vmor %vm1496, %vm1497
    %v1499 = vsel %vm1498, %v1491, %v1495
    %v1500 = vand.u32 2147483647, %v1391
    %vm1501 = vcmp.eq.f32.partialorder %v1500, 8.507059e+37
    %v1502 = vand.u32 %v1391, 2147483648
    %v1503 = vor.u32 1.1754944e-38, %v1502
    %v1504 = vsel %vm1501, %v1503, %v1499
    %v1505 = vmul.f32 %v1375, %v1504
    %v1506 = vrcp.pop %v1392
    %v1507 = vmul.f32 %v1392, %v1506
    %v1508 = vsub.f32 1.0, %v1507
    %v1509 = vmul.f32 %v1506, %v1508
    %v1510 = vadd.f32 %v1506, %v1509
    %vm1511 = vweird.f32 %v1392
    %vm1512 = vweird.f32 %v1506
    %vm1513 = vmor %vm1511, %vm1512
    %v1514 = vsel %vm1513, %v1506, %v1510
    %v1515 = vand.u32 2147483647, %v1392
    %vm1516 = vcmp.eq.f32.partialorder %v1515, 8.507059e+37
    %v1517 = vand.u32 %v1392, 2147483648
    %v1518 = vor.u32 1.1754944e-38, %v1517
    %v1519 = vsel %vm1516, %v1518, %v1514
    %v1520 = vmul.f32 %v1376, %v1519
    %v1521 = vrcp.pop %v1393
    %v1522 = vmul.f32 %v1393, %v1521
    %v1523 = vsub.f32 1.0, %v1522
    %v1524 = vmul.f32 %v1521, %v1523
    %v1525 = vadd.f32 %v1521, %v1524
    %vm1526 = vweird.f32 %v1393
    %vm1527 = vweird.f32 %v1521
    %vm1528 = vmor %vm1526, %vm1527
    %v1529 = vsel %vm1528, %v1521, %v1525
    %v1530 = vand.u32 2147483647, %v1393
    %vm1531 = vcmp.eq.f32.partialorder %v1530, 8.507059e+37
    %v1532 = vand.u32 %v1393, 2147483648
    %v1533 = vor.u32 1.1754944e-38, %v1532
    %v1534 = vsel %vm1531, %v1533, %v1529
    %v1535 = vmul.f32 %v1377, %v1534
    %v1536 = vrcp.pop %v1394
    %v1537 = vmul.f32 %v1394, %v1536
    %v1538 = vsub.f32 1.0, %v1537
    %v1539 = vmul.f32 %v1536, %v1538
    %v1540 = vadd.f32 %v1536, %v1539
    %vm1541 = vweird.f32 %v1394
    %vm1542 = vweird.f32 %v1536
    %vm1543 = vmor %vm1541, %vm1542
    %v1544 = vsel %vm1543, %v1536, %v1540
    %v1545 = vand.u32 2147483647, %v1394
    %vm1546 = vcmp.eq.f32.partialorder %v1545, 8.507059e+37
    %v1547 = vand.u32 %v1394, 2147483648
    %v1548 = vor.u32 1.1754944e-38, %v1547
    %v1549 = vsel %vm1546, %v1548, %v1544
    %v1550 = vmul.f32 %v1378, %v1549
    %v1551 = vrcp.pop %v1395
    %v1552 = vmul.f32 %v1395, %v1551
    %v1553 = vsub.f32 1.0, %v1552
    %v1554 = vmul.f32 %v1551, %v1553
    %v1555 = vadd.f32 %v1551, %v1554
    %vm1556 = vweird.f32 %v1395
    %vm1557 = vweird.f32 %v1551
    %vm1558 = vmor %vm1556, %vm1557
    %v1559 = vsel %vm1558, %v1551, %v1555
    %v1560 = vand.u32 2147483647, %v1395
    %vm1561 = vcmp.eq.f32.partialorder %v1560, 8.507059e+37
    %v1562 = vand.u32 %v1395, 2147483648
    %v1563 = vor.u32 1.1754944e-38, %v1562
    %v1564 = vsel %vm1561, %v1563, %v1559
    %v1565 = vmul.f32 %v1379, %v1564
    %v1566 = vrcp.pop %v1396
    %v1567 = vmul.f32 %v1396, %v1566
    %v1568 = vsub.f32 1.0, %v1567
    %v1569 = vmul.f32 %v1566, %v1568
    %v1570 = vadd.f32 %v1566, %v1569
    %vm1571 = vweird.f32 %v1396
    %vm1572 = vweird.f32 %v1566
    %vm1573 = vmor %vm1571, %vm1572
    %v1574 = vsel %vm1573, %v1566, %v1570
    %v1575 = vand.u32 2147483647, %v1396
    %vm1576 = vcmp.eq.f32.partialorder %v1575, 8.507059e+37
    %v1577 = vand.u32 %v1396, 2147483648
    %v1578 = vor.u32 1.1754944e-38, %v1577
    %v1579 = vsel %vm1576, %v1578, %v1574
    %v1580 = vmul.f32 %v1380, %v1579
    %v1581 = vrcp.pop %v1397
    %v1582 = vmul.f32 %v1397, %v1581
    %v1583 = vsub.f32 1.0, %v1582
    %v1584 = vmul.f32 %v1581, %v1583
    %v1585 = vadd.f32 %v1581, %v1584
    %vm1586 = vweird.f32 %v1397
    %vm1587 = vweird.f32 %v1581
    %vm1588 = vmor %vm1586, %vm1587
    %v1589 = vsel %vm1588, %v1581, %v1585
    %v1590 = vand.u32 2147483647, %v1397
    %vm1591 = vcmp.eq.f32.partialorder %v1590, 8.507059e+37
    %v1592 = vand.u32 %v1397, 2147483648
    %v1593 = vor.u32 1.1754944e-38, %v1592
    %v1594 = vsel %vm1591, %v1593, %v1589
    %v1595 = vmul.f32 %v1381, %v1594
    %v1596 = vrcp.pop %v1398
    %v1597 = vmul.f32 %v1398, %v1596
    %v1598 = vsub.f32 1.0, %v1597
    %v1599 = vmul.f32 %v1596, %v1598
    %v1600 = vadd.f32 %v1596, %v1599
    %vm1601 = vweird.f32 %v1398
    %vm1602 = vweird.f32 %v1596
    %vm1603 = vmor %vm1601, %vm1602
    %v1604 = vsel %vm1603, %v1596, %v1600
    %v1605 = vand.u32 2147483647, %v1398
    %vm1606 = vcmp.eq.f32.partialorder %v1605, 8.507059e+37
    %v1607 = vand.u32 %v1398, 2147483648
    %v1608 = vor.u32 1.1754944e-38, %v1607
    %v1609 = vsel %vm1606, %v1608, %v1604
    %v1610 = vmul.f32 %v1382, %v1609
    %v1611 = vrcp.pop %v1399
    %v1612 = vmul.f32 %v1399, %v1611
    %v1613 = vsub.f32 1.0, %v1612
    %v1614 = vmul.f32 %v1611, %v1613
    %v1615 = vadd.f32 %v1611, %v1614
    %vm1616 = vweird.f32 %v1399
    %vm1617 = vweird.f32 %v1611
    %vm1618 = vmor %vm1616, %vm1617
    %v1619 = vsel %vm1618, %v1611, %v1615
    %v1620 = vand.u32 2147483647, %v1399
    %vm1621 = vcmp.eq.f32.partialorder %v1620, 8.507059e+37
    %v1622 = vand.u32 %v1399, 2147483648
    %v1623 = vor.u32 1.1754944e-38, %v1622
    %v1624 = vsel %vm1621, %v1623, %v1619
    %v1625 = vmul.f32 %v1383, %v1624
    %v1626 = vrcp.pop %v1400
    %v1627 = vmul.f32 %v1400, %v1626
    %v1628 = vsub.f32 1.0, %v1627
    %v1629 = vmul.f32 %v1626, %v1628
    %v1630 = vadd.f32 %v1626, %v1629
    %vm1631 = vweird.f32 %v1400
    %vm1632 = vweird.f32 %v1626
    %vm1633 = vmor %vm1631, %vm1632
    %v1634 = vsel %vm1633, %v1626, %v1630
    %v1635 = vand.u32 2147483647, %v1400
    %vm1636 = vcmp.eq.f32.partialorder %v1635, 8.507059e+37
    %v1637 = vand.u32 %v1400, 2147483648
    %v1638 = vor.u32 1.1754944e-38, %v1637
    %v1639 = vsel %vm1636, %v1638, %v1634
    %v1640 = vmul.f32 %v1384, %v1639
    %1641 = vst.msk [vmem:[%s5] sm:$0xff] %vm1205, %v1415
    %1642 = vst.msk [vmem:[%s5 + $0x8] sm:$0xff] %vm1205, %v1430
    %1643 = vst.msk [vmem:[%s5 + $0x10] sm:$0xff] %vm1205, %v1445
    %1644 = vst.msk [vmem:[%s5 + $0x18] sm:$0xff] %vm1205, %v1460
    %1645 = vst.msk [vmem:[%s5 + $0x20] sm:$0xff] %vm1205, %v1475
    %1646 = vst.msk [vmem:[%s5 + $0x28] sm:$0xff] %vm1205, %v1490
    %1647 = vst.msk [vmem:[%s5 + $0x30] sm:$0xff] %vm1205, %v1505
    %1648 = vst.msk [vmem:[%s5 + $0x38] sm:$0xff] %vm1205, %v1520
    %1649 = vst.msk [vmem:[%s5 + $0x40] sm:$0xff] %vm1205, %v1535
    %1650 = vst.msk [vmem:[%s5 + $0x48] sm:$0xff] %vm1205, %v1550
    %1651 = vst.msk [vmem:[%s5 + $0x50] sm:$0xff] %vm1205, %v1565
    %1652 = vst.msk [vmem:[%s5 + $0x58] sm:$0xff] %vm1205, %v1580
    %1653 = vst.msk [vmem:[%s5 + $0x60] sm:$0xff] %vm1205, %v1595
    %1654 = vst.msk [vmem:[%s5 + $0x68] sm:$0xff] %vm1205, %v1610
    %1655 = vst.msk [vmem:[%s5 + $0x70] sm:$0xff] %vm1205, %v1625
    %1656 = vst.msk [vmem:[%s5 + $0x78] sm:$0xff] %vm1205, %v1640
  $region37: #{tpu_custom_call.1} parent=0 // pred_fallthru
    _
  // Predicated region
  $region38: #{tpu_custom_call.1} parent=0 // pred_check
    _
  $region39: #{tpu_custom_call.1} parent=0 // pred_check_branch
    %1658 = sbr.rel (0) target = $region41
  $region40: #{tpu_custom_call.1} parent=0 // pred_region
    _
  $region41: #{tpu_custom_call.1} parent=0 // pred_fallthru
    _
  // Predicated region
  $region42: #{tpu_custom_call.1} parent=0 // pred_check
    _
  $region43: #{tpu_custom_call.1} parent=0 // pred_check_branch
    %1660 = sbr.rel (0) target = $region45
  $region44: #{tpu_custom_call.1} parent=0 // pred_region
    _
  $region45: #{tpu_custom_call.1} parent=0 // pred_fallthru
    _

</llo_original>
